<compile_context>
chip_gen: v7x
topology: tpu7x:2x2x1
jax: 0.10.0
libtpu: 0.0.40
codegen_flags: <defaults>
</compile_context>

<pallas_src>
import functools

import jax
import jax.numpy as jnp
from jax.experimental import pallas as pl
from jax.experimental.pallas import tpu as pltpu


LANE = 128
SUBLANE = 8
ROW_TILE = 256                  # node row tile / N padding granularity (MXU cadence)

_FUSED_VMEM_BUDGET = 40 << 20   # take the fused single-kernel path below this
_VMEM_CAP = 60 << 20            # stay under v7x's 64 MiB physical VMEM per core


def _round_up(n, m):
    return ((n + m - 1) // m) * m


def _pad2d(a, rows, cols):
    a = jnp.asarray(a)
    out = jnp.zeros((rows, cols), a.dtype)
    return out.at[: a.shape[0], : a.shape[1]].set(a)


# --------------------------------------------------------------------------- #
# Shared math: GraphConv block = relu(agg @ W_rel + rows @ W_root + b) as two
# bf16 MXU dots with f32 accumulation (no concatenate), and the MLP head.
# --------------------------------------------------------------------------- #
def _graph_conv(agg_f32, rows_bf16, wr_ref, ws_ref, b_ref):
    h = (jnp.dot(agg_f32.astype(jnp.bfloat16), wr_ref[...],
                 preferred_element_type=jnp.float32)
         + jnp.dot(rows_bf16, ws_ref[...], preferred_element_type=jnp.float32)
         + b_ref[...])
    return jnp.maximum(h, 0.0)


def _mlp_head(pooled_f32, wl1_ref, bl1_ref, wl2_ref, bl2_ref):
    z = jnp.maximum(
        jnp.dot(pooled_f32, wl1_ref[...], preferred_element_type=jnp.float32)
        + bl1_ref[...], 0.0)
    return (jnp.dot(z, wl2_ref[...], preferred_element_type=jnp.float32)
            + bl2_ref[...])


# --------------------------------------------------------------------------- #
# Fused kernel: whole GCNN forward in one shot (A resident in VMEM).
# --------------------------------------------------------------------------- #
def fused_gcnn_kernel(a_ref, x_ref, p_ref, cnt_ref,
                      w1r_ref, w1s_ref, b1_ref,
                      w2r_ref, w2s_ref, b2_ref,
                      wl1_ref, bl1_ref, wl2_ref, bl2_ref,
                      out_ref):
    a = a_ref[...]
    x = x_ref[...]
    h1 = _graph_conv(jnp.dot(a, x, preferred_element_type=jnp.float32),
                     x, w1r_ref, w1s_ref, b1_ref).astype(jnp.bfloat16)
    h2 = _graph_conv(jnp.dot(a, h1, preferred_element_type=jnp.float32),
                     h1, w2r_ref, w2s_ref, b2_ref)
    pooled = jnp.dot(p_ref[...], h2.astype(jnp.bfloat16),
                     preferred_element_type=jnp.float32) / cnt_ref[...]
    # TODO(synk): training-mode dropout on `pooled` not implemented (inference only).
    out_ref[...] = _mlp_head(pooled, wl1_ref, bl1_ref, wl2_ref, bl2_ref)


# --------------------------------------------------------------------------- #
# Streamed kernel 1: GraphConv layer 1 over node row-tiles ("parallel" axis).
# Root-term rows are sliced from the resident x block (no duplicate stream).
# --------------------------------------------------------------------------- #
def conv1_kernel(a_ref, xfull_ref, w1r_ref, w1s_ref, b1_ref, h1_ref, *, tm):
    i = pl.program_id(0)
    row0 = pl.multiple_of(i * tm, tm)
    x_rows = xfull_ref[pl.ds(row0, tm), :]
    agg = jnp.dot(a_ref[...], xfull_ref[...], preferred_element_type=jnp.float32)
    h1_ref[...] = _graph_conv(agg, x_rows, w1r_ref, w1s_ref, b1_ref).astype(h1_ref.dtype)


# --------------------------------------------------------------------------- #
# Streamed kernel 2: GraphConv layer 2 + mean-pool + MLP head.
# Row-tile axis is a reduction into the pooled VMEM accumulator ("arbitrary").
# --------------------------------------------------------------------------- #
def conv2_pool_head_kernel(a_ref, h1full_ref, p_ref, cnt_ref,
                           w2r_ref, w2s_ref, b2_ref,
                           wl1_ref, bl1_ref, wl2_ref, bl2_ref,
                           out_ref, pooled_acc, *, tm):
    i = pl.program_id(0)

    @pl.when(i == 0)
    def _():
        pooled_acc[...] = jnp.zeros_like(pooled_acc)

    row0 = pl.multiple_of(i * tm, tm)
    h1_rows = h1full_ref[pl.ds(row0, tm), :]
    agg = jnp.dot(a_ref[...], h1full_ref[...], preferred_element_type=jnp.float32)
    h2 = _graph_conv(agg, h1_rows, w2r_ref, w2s_ref, b2_ref)

    # 0/1 bf16 indicator pooling; division by counts deferred to the epilogue.
    pooled_acc[...] += jnp.dot(p_ref[...], h2.astype(jnp.bfloat16),
                               preferred_element_type=jnp.float32)

    # TODO(synk): training-mode dropout on the pooled features not implemented.
    @pl.when(i == pl.num_programs(0) - 1)
    def _():
        pooled = pooled_acc[...] / cnt_ref[...]
        out_ref[...] = _mlp_head(pooled, wl1_ref, bl1_ref, wl2_ref, bl2_ref)


# --------------------------------------------------------------------------- #
# Wrapper: padding / dense A / pooling matrix construction + path dispatch.
# --------------------------------------------------------------------------- #
def _prepare(x, edge_index, edge_attr, batch, params, num_graphs):
    N, F = x.shape
    w1_rel, b1, w1_root, w2_rel, b2, w2_root, wl1, bl1, wl2, bl2 = params
    H = w1_rel.shape[1]

    N_pad = _round_up(max(N, ROW_TILE), ROW_TILE)
    F_pad = _round_up(max(F, LANE), LANE)
    H_pad = _round_up(max(H, LANE), LANE)
    HEAD = LANE
    B_pad = _round_up(max(num_graphs, SUBLANE), SUBLANE)

    # Dense adjacency A[i, j] = sum of edge weights of edges j -> i (PyG "add" aggr).
    src, dst = edge_index[0], edge_index[1]
    ew = edge_attr.reshape(-1).astype(jnp.float32)
    A_bf = (jnp.zeros((N_pad, N_pad), jnp.float32).at[dst, src].add(ew)
            ).astype(jnp.bfloat16)
    # TODO(synk): for large sparse graphs replace dense A with a CSR gather
    # (scalar-prefetch row pointers + manual DMA) and quantize A to int8 (v5e/v6e)
    # / fp8 (v7x) to halve the dominant HBM stream.

    # 0/1 pooling indicator (exact in bf16); per-graph counts divided in the epilogue.
    one_hot = (batch[None, :] == jnp.arange(num_graphs)[:, None]).astype(jnp.float32)
    counts = jnp.maximum(one_hot.sum(axis=1, keepdims=True), 1.0)
    P_bf = _pad2d(one_hot, B_pad, N_pad).astype(jnp.bfloat16)
    cnt = jnp.ones((B_pad, 1), jnp.float32).at[:num_graphs, :].set(counts)

    x_bf = _pad2d(x.astype(jnp.float32), N_pad, F_pad).astype(jnp.bfloat16)

    w1r = _pad2d(w1_rel, F_pad, H_pad).astype(jnp.bfloat16)
    w1s = _pad2d(w1_root, F_pad, H_pad).astype(jnp.bfloat16)
    w2r = _pad2d(w2_rel, H_pad, H_pad).astype(jnp.bfloat16)
    w2s = _pad2d(w2_root, H_pad, H_pad).astype(jnp.bfloat16)
    b1p = _pad2d(b1.reshape(1, -1), 1, H_pad)
    b2p = _pad2d(b2.reshape(1, -1), 1, H_pad)
    wl1p = _pad2d(wl1, H_pad, HEAD)
    bl1p = _pad2d(bl1.reshape(1, -1), 1, HEAD)
    wl2p = _pad2d(wl2, HEAD, HEAD)
    bl2p = _pad2d(bl2.reshape(1, -1), 1, HEAD)

    ops = (A_bf, x_bf, P_bf, cnt, w1r, w1s, b1p, w2r, w2s, b2p, wl1p, bl1p, wl2p, bl2p)
    dims = (N_pad, F_pad, H_pad, HEAD, B_pad)
    return ops, dims


def _fused_vmem_estimate(dims):
    N_pad, F_pad, H_pad, HEAD, B_pad = dims
    weights = 2 * (2 * F_pad * H_pad + 2 * H_pad * H_pad)
    head = 4 * (H_pad * HEAD + HEAD * HEAD + 2 * HEAD + 2 * H_pad)
    inputs = (2 * N_pad * N_pad + 2 * N_pad * F_pad + 2 * B_pad * N_pad
              + 4 * B_pad + weights + head)
    temps = 4 * N_pad * F_pad + N_pad * H_pad * (4 + 2 + 4 + 4 + 2)
    out = 4 * B_pad * HEAD
    return int(1.3 * (inputs + temps + out)) + (8 << 20)


def _fused_forward(ops, dims, vmem_est):
    N_pad, F_pad, H_pad, HEAD, B_pad = dims
    flops = (2 * N_pad * N_pad * (F_pad + H_pad)
             + 4 * N_pad * H_pad * (F_pad + H_pad)
             + 2 * B_pad * N_pad * H_pad
             + 2 * B_pad * HEAD * (H_pad + HEAD))
    bytes_accessed = (2 * (N_pad * N_pad + N_pad * F_pad + B_pad * N_pad
                           + 2 * F_pad * H_pad + 2 * H_pad * H_pad)
                      + 4 * (H_pad * HEAD + HEAD * HEAD + 2 * H_pad + 2 * HEAD
                             + B_pad + B_pad * HEAD))
    return pl.pallas_call(
        fused_gcnn_kernel,
        out_shape=jax.ShapeDtypeStruct((B_pad, HEAD), jnp.float32),
        compiler_params=pltpu.CompilerParams(
            vmem_limit_bytes=int(min(vmem_est, _VMEM_CAP))),
        cost_estimate=pl.CostEstimate(flops=flops, transcendentals=0,
                                      bytes_accessed=bytes_accessed),
    )(*ops)


def _streamed_forward(ops, dims, *, single_buffer_residents=True):
    (A_bf, x_bf, P_bf, cnt, w1r, w1s, b1p, w2r, w2s, b2p,
     wl1p, bl1p, wl2p, bl2p) = ops
    N_pad, F_pad, H_pad, HEAD, B_pad = dims
    tm = ROW_TILE
    num_tiles = N_pad // tm

    def _resident(shape, index_map):
        # Grid-invariant block: a single VMEM buffer is enough (the default double
        # buffer just burns VMEM, which matters on v7x's 64 MiB).
        if single_buffer_residents:
            return pl.BlockSpec(shape, index_map, pipeline_mode=pl.Buffered(1))
        return pl.BlockSpec(shape, index_map)

    # ----------------------- kernel 1: conv1 ----------------------- #
    vmem1 = int(1.5 * (2 * 2 * tm * N_pad            # A strip bf16, double-buffered
                       + 2 * 2 * N_pad * F_pad       # resident x (x2 safety margin)
                       + 2 * (2 * 2 * F_pad * H_pad + 4 * H_pad)
                       + 2 * 2 * tm * H_pad          # h1 out tile, double-buffered
                       + 4 * tm * F_pad + 4 * tm * H_pad)) + (8 << 20)
    flops1 = 2 * N_pad * N_pad * F_pad + 4 * N_pad * F_pad * H_pad
    bytes1 = (2 * (N_pad * N_pad + N_pad * F_pad + 2 * F_pad * H_pad + N_pad * H_pad)
              + 4 * H_pad)
    h1 = pl.pallas_call(
        functools.partial(conv1_kernel, tm=tm),
        out_shape=jax.ShapeDtypeStruct((N_pad, H_pad), jnp.bfloat16),
        grid=(num_tiles,),
        in_specs=[
            pl.BlockSpec((tm, N_pad), lambda i: (i, 0)),        # A row strip (streamed)
            _resident((N_pad, F_pad), lambda i: (0, 0)),        # x, resident
            _resident((F_pad, H_pad), lambda i: (0, 0)),        # W1_rel
            _resident((F_pad, H_pad), lambda i: (0, 0)),        # W1_root
            _resident((1, H_pad), lambda i: (0, 0)),            # b1
        ],
        out_specs=pl.BlockSpec((tm, H_pad), lambda i: (i, 0)),
        compiler_params=pltpu.CompilerParams(
            dimension_semantics=("parallel",),
            vmem_limit_bytes=int(min(vmem1, _VMEM_CAP))),
        cost_estimate=pl.CostEstimate(flops=flops1, transcendentals=0,
                                      bytes_accessed=bytes1),
    )(A_bf, x_bf, w1r, w1s, b1p)

    # ------------- kernel 2: conv2 + mean-pool + head -------------- #
    # TODO(synk): on v7x, split this reduction across the 2 TensorCores (partial
    # pooled accumulators + tiny combine epilogue) instead of one "arbitrary" axis.
    # TODO(synk): for very large N, also tile the contraction axis (A in (tm, tk)
    # blocks) so per-step VMEM is independent of N.
    vmem2 = int(1.5 * (2 * 2 * tm * N_pad                        # A strip
                       + 2 * 2 * N_pad * H_pad                   # resident h1 (x2 safety)
                       + 2 * 2 * B_pad * tm                      # P column tile
                       + 2 * 4 * B_pad                           # counts
                       + 2 * (2 * 2 * H_pad * H_pad + 4 * H_pad)
                       + 2 * 4 * (H_pad * HEAD + HEAD * HEAD + 2 * HEAD)
                       + 4 * B_pad * H_pad                       # pooled_acc scratch
                       + 2 * 4 * B_pad * HEAD                    # out
                       + 2 * 4 * tm * H_pad + 4 * B_pad * H_pad)) + (8 << 20)
    flops2 = (2 * N_pad * N_pad * H_pad + 4 * N_pad * H_pad * H_pad
              + 2 * B_pad * N_pad * H_pad + 2 * B_pad * HEAD * (H_pad + HEAD))
    bytes2 = (2 * (N_pad * N_pad + N_pad * H_pad + B_pad * N_pad + 2 * H_pad * H_pad)
              + 4 * (H_pad + H_pad * HEAD + HEAD * HEAD + 2 * HEAD + B_pad
                     + B_pad * HEAD))
    out_pad = pl.pallas_call(
        functools.partial(conv2_pool_head_kernel, tm=tm),
        out_shape=jax.ShapeDtypeStruct((B_pad, HEAD), jnp.float32),
        grid=(num_tiles,),
        in_specs=[
            pl.BlockSpec((tm, N_pad), lambda i: (i, 0)),         # A row strip
            _resident((N_pad, H_pad), lambda i: (0, 0)),         # h1, resident
            pl.BlockSpec((B_pad, tm), lambda i: (0, i)),         # P column tile (bf16)
            _resident((B_pad, 1), lambda i: (0, 0)),             # per-graph counts
            _resident((H_pad, H_pad), lambda i: (0, 0)),         # W2_rel
            _resident((H_pad, H_pad), lambda i: (0, 0)),         # W2_root
            _resident((1, H_pad), lambda i: (0, 0)),             # b2
            _resident((H_pad, HEAD), lambda i: (0, 0)),          # lin1 W
            _resident((1, HEAD), lambda i: (0, 0)),              # lin1 b
            _resident((HEAD, HEAD), lambda i: (0, 0)),           # lin2 W
            _resident((1, HEAD), lambda i: (0, 0)),              # lin2 b
        ],
        out_specs=pl.BlockSpec((B_pad, HEAD), lambda i: (0, 0)),
        scratch_shapes=[pltpu.VMEM((B_pad, H_pad), jnp.float32)],
        compiler_params=pltpu.CompilerParams(
            dimension_semantics=("arbitrary",),
            vmem_limit_bytes=int(min(vmem2, _VMEM_CAP))),
        cost_estimate=pl.CostEstimate(flops=flops2, transcendentals=0,
                                      bytes_accessed=bytes2),
    )(A_bf, h1, P_bf, cnt, w2r, w2s, b2p, wl1p, bl1p, wl2p, bl2p)
    return out_pad


def gcnn_forward(x, edge_index, edge_attr, batch, params, num_graphs, *,
                 force_streamed=False):
    ops, dims = _prepare(x, edge_index, edge_attr, batch, params, num_graphs)
    fused_est = _fused_vmem_estimate(dims)
    if not force_streamed and fused_est <= _FUSED_VMEM_BUDGET:
        out_pad = _fused_forward(ops, dims, fused_est)
    else:
        try:
            out_pad = _streamed_forward(ops, dims, single_buffer_residents=True)
        except Exception:
            # Fallback if the installed Mosaic rejects pipeline_mode=pl.Buffered(1)
            # on top-level BlockSpecs; math is identical.
            out_pad = _streamed_forward(ops, dims, single_buffer_residents=False)
    return out_pad[:num_graphs, :1]


# --------------------------------------------------------------------------- #
# Pure-JAX reference (f32) and synthetic parameters.
# --------------------------------------------------------------------------- #
def gcnn_reference(x, edge_index, edge_attr, batch, params, num_graphs):
    w1r, b1, w1s, w2r, b2, w2s, wl1, bl1, wl2, bl2 = params
    N = x.shape[0]
    src, dst = edge_index[0], edge_index[1]
    ew = edge_attr.reshape(-1).astype(jnp.float32)
    A = jnp.zeros((N, N), jnp.float32).at[dst, src].add(ew)
    h1 = jnp.maximum((A @ x) @ w1r + x @ w1s + b1, 0.0)
    h2 = jnp.maximum((A @ h1) @ w2r + h1 @ w2s + b2, 0.0)
    one_hot = (batch[None, :] == jnp.arange(num_graphs)[:, None]).astype(jnp.float32)
    counts = jnp.maximum(one_hot.sum(axis=1, keepdims=True), 1.0)
    pooled = (one_hot @ h2) / counts
    z = jnp.maximum(pooled @ wl1 + bl1, 0.0)
    return z @ wl2 + bl2


def init_params(key, features_channels, hidden_channels):
    """Deterministic synthetic parameters (shapes match the PyTorch module)."""
    ks = jax.random.split(key, 10)

    def lin(k, fan_in, fan_out):
        bound = 1.0 / jnp.sqrt(fan_in)
        return jax.random.uniform(k, (fan_in, fan_out), jnp.float32, -bound, bound)

    def bias(k, fan_in, fan_out):
        bound = 1.0 / jnp.sqrt(fan_in)
        return jax.random.uniform(k, (fan_out,), jnp.float32, -bound, bound)

    F, H = features_channels, hidden_channels
    w1_rel = lin(ks[0], F, H); b1_rel = bias(ks[1], F, H)   # conv1.lin_rel (bias=True)
    w1_root = lin(ks[2], F, H)                              # conv1.lin_root (bias=False)
    w2_rel = lin(ks[3], H, H); b2_rel = bias(ks[4], H, H)   # conv2.lin_rel
    w2_root = lin(ks[5], H, H)                              # conv2.lin_root
    wl1 = lin(ks[6], H, 16);   bl1 = bias(ks[7], H, 16)     # lin1
    wl2 = lin(ks[8], 16, 1);   bl2 = bias(ks[9], 16, 1)     # lin2
    return (w1_rel, b1_rel, w1_root, w2_rel, b2_rel, w2_root, wl1, bl1, wl2, bl2)


if __name__ == "__main__":
    root = jax.random.PRNGKey(0)
    k_demo, k_big = jax.random.split(root)

    # Demo case: 16 nodes, 4 input features, 32 hidden channels, 2 graphs, 40 edges.
    N, F, H, B, E = 16, 4, 32, 2, 40
    k_x, k_ei, k_ea, k_p = jax.random.split(k_demo, 4)
    x = jax.random.normal(k_x, (N, F), jnp.float32)
    edge_index = jax.random.randint(k_ei, (2, E), 0, N, jnp.int32)
    edge_attr = jax.random.uniform(k_ea, (E,), jnp.float32)
    batch = jnp.concatenate([jnp.zeros(N // 2, jnp.int32),
                             jnp.ones(N - N // 2, jnp.int32)])
    params = init_params(k_p, F, H)

    ref = gcnn_reference(x, edge_index, edge_attr, batch, params, B)

    # Fused single-kernel path (auto-dispatched at this size).
    out = gcnn_forward(x, edge_index, edge_attr, batch, params, num_graphs=B)
    jax.block_until_ready(out)
    assert out.shape == (B, 1)
    assert jnp.allclose(out, ref, rtol=5e-2, atol=5e-2), (out, ref)

    # Streamed two-kernel path on the same input.
    out_s = gcnn_forward(x, edge_index, edge_attr, batch, params, num_graphs=B,
                         force_streamed=True)
    jax.block_until_ready(out_s)
    assert jnp.allclose(out_s, ref, rtol=5e-2, atol=5e-2), (out_s, ref)

    # Multi-tile streamed check (300 nodes -> 2 row tiles, 3 graphs).
    N2, B2, E2 = 300, 3, 900
    k_x2, k_ei2, k_ea2 = jax.random.split(k_big, 3)
    x2 = jax.random.normal(k_x2, (N2, F), jnp.float32)
    edge_index2 = jax.random.randint(k_ei2, (2, E2), 0, N2, jnp.int32)
    edge_attr2 = jax.random.uniform(k_ea2, (E2,), jnp.float32)
    batch2 = jnp.repeat(jnp.arange(B2, dtype=jnp.int32), N2 // B2)
    out2 = gcnn_forward(x2, edge_index2, edge_attr2, batch2, params, num_graphs=B2,
                        force_streamed=True)
    jax.block_until_ready(out2)
    ref2 = gcnn_reference(x2, edge_index2, edge_attr2, batch2, params, B2)
    assert out2.shape == (B2, 1)
    assert jnp.allclose(out2, ref2, rtol=5e-2, atol=5e-2), (out2, ref2)

    print("KERNEL_OK")
</pallas_src>

<mosaic_0001>
module attributes {stable_mosaic.version = 11 : i64} {
  func.func @fused_gcnn_kernel(%arg0: memref<256x256xbf16, #tpu.memory_space<vmem>>, %arg1: memref<256x128xbf16, #tpu.memory_space<vmem>>, %arg2: memref<8x256xbf16, #tpu.memory_space<vmem>>, %arg3: memref<8x1xf32, #tpu.memory_space<vmem>>, %arg4: memref<128x128xbf16, #tpu.memory_space<vmem>>, %arg5: memref<128x128xbf16, #tpu.memory_space<vmem>>, %arg6: memref<1x128xf32, #tpu.memory_space<vmem>>, %arg7: memref<128x128xbf16, #tpu.memory_space<vmem>>, %arg8: memref<128x128xbf16, #tpu.memory_space<vmem>>, %arg9: memref<1x128xf32, #tpu.memory_space<vmem>>, %arg10: memref<128x128xf32, #tpu.memory_space<vmem>>, %arg11: memref<1x128xf32, #tpu.memory_space<vmem>>, %arg12: memref<128x128xf32, #tpu.memory_space<vmem>>, %arg13: memref<1x128xf32, #tpu.memory_space<vmem>>, %arg14: memref<8x128xf32, #tpu.memory_space<vmem>>) attributes {dimension_semantics = [], scalar_prefetch = 0 : i64, scratch_operands = 0 : i64, tpu.core_type = #tpu.core_type<tc>} {
    %c0 = arith.constant 0 : index
    %c0_0 = arith.constant 0 : index
    %0 = vector.load %arg0[%c0, %c0_0] : memref<256x256xbf16, #tpu.memory_space<vmem>>, vector<256x256xbf16>
    %c0_1 = arith.constant 0 : index
    %c0_2 = arith.constant 0 : index
    %1 = vector.load %arg1[%c0_1, %c0_2] : memref<256x128xbf16, #tpu.memory_space<vmem>>, vector<256x128xbf16>
    %cst = arith.constant dense<0.000000e+00> : vector<256x128xf32>
    %2 = tpu.matmul %0, %1, %cst {dimension_numbers = #tpu.dot_dimension_numbers<[1], [0], [0], [1], [0, 0, 1, 1], [], []>} : vector<256x256xbf16>, vector<256x128xbf16>, vector<256x128xf32> -> vector<256x128xf32>
    %3 = arith.truncf %2 : vector<256x128xf32> to vector<256x128xbf16>
    %c0_3 = arith.constant 0 : index
    %c0_4 = arith.constant 0 : index
    %4 = vector.load %arg4[%c0_3, %c0_4] : memref<128x128xbf16, #tpu.memory_space<vmem>>, vector<128x128xbf16>
    %cst_5 = arith.constant dense<0.000000e+00> : vector<256x128xf32>
    %5 = tpu.matmul %3, %4, %cst_5 {dimension_numbers = #tpu.dot_dimension_numbers<[1], [0], [0], [1], [0, 0, 1, 1], [], []>} : vector<256x128xbf16>, vector<128x128xbf16>, vector<256x128xf32> -> vector<256x128xf32>
    %c0_6 = arith.constant 0 : index
    %c0_7 = arith.constant 0 : index
    %6 = vector.load %arg5[%c0_6, %c0_7] : memref<128x128xbf16, #tpu.memory_space<vmem>>, vector<128x128xbf16>
    %cst_8 = arith.constant dense<0.000000e+00> : vector<256x128xf32>
    %7 = tpu.matmul %1, %6, %cst_8 {dimension_numbers = #tpu.dot_dimension_numbers<[1], [0], [0], [1], [0, 0, 1, 1], [], []>} : vector<256x128xbf16>, vector<128x128xbf16>, vector<256x128xf32> -> vector<256x128xf32>
    %8 = arith.addf %5, %7 : vector<256x128xf32>
    %c0_9 = arith.constant 0 : index
    %c0_10 = arith.constant 0 : index
    %9 = vector.load %arg6[%c0_9, %c0_10] : memref<1x128xf32, #tpu.memory_space<vmem>>, vector<1x128xf32>
    %10 = vector.broadcast %9 : vector<1x128xf32> to vector<256x128xf32>
    %11 = arith.addf %8, %10 : vector<256x128xf32>
    %cst_11 = arith.constant 0.000000e+00 : f32
    %12 = vector.broadcast %cst_11 : f32 to vector<256x128xf32>
    %13 = arith.maximumf %11, %12 : vector<256x128xf32>
    %14 = arith.truncf %13 : vector<256x128xf32> to vector<256x128xbf16>
    %cst_12 = arith.constant dense<0.000000e+00> : vector<256x128xf32>
    %15 = tpu.matmul %0, %14, %cst_12 {dimension_numbers = #tpu.dot_dimension_numbers<[1], [0], [0], [1], [0, 0, 1, 1], [], []>} : vector<256x256xbf16>, vector<256x128xbf16>, vector<256x128xf32> -> vector<256x128xf32>
    %16 = arith.truncf %15 : vector<256x128xf32> to vector<256x128xbf16>
    %c0_13 = arith.constant 0 : index
    %c0_14 = arith.constant 0 : index
    %17 = vector.load %arg7[%c0_13, %c0_14] : memref<128x128xbf16, #tpu.memory_space<vmem>>, vector<128x128xbf16>
    %cst_15 = arith.constant dense<0.000000e+00> : vector<256x128xf32>
    %18 = tpu.matmul %16, %17, %cst_15 {dimension_numbers = #tpu.dot_dimension_numbers<[1], [0], [0], [1], [0, 0, 1, 1], [], []>} : vector<256x128xbf16>, vector<128x128xbf16>, vector<256x128xf32> -> vector<256x128xf32>
    %c0_16 = arith.constant 0 : index
    %c0_17 = arith.constant 0 : index
    %19 = vector.load %arg8[%c0_16, %c0_17] : memref<128x128xbf16, #tpu.memory_space<vmem>>, vector<128x128xbf16>
    %cst_18 = arith.constant dense<0.000000e+00> : vector<256x128xf32>
    %20 = tpu.matmul %14, %19, %cst_18 {dimension_numbers = #tpu.dot_dimension_numbers<[1], [0], [0], [1], [0, 0, 1, 1], [], []>} : vector<256x128xbf16>, vector<128x128xbf16>, vector<256x128xf32> -> vector<256x128xf32>
    %21 = arith.addf %18, %20 : vector<256x128xf32>
    %c0_19 = arith.constant 0 : index
    %c0_20 = arith.constant 0 : index
    %22 = vector.load %arg9[%c0_19, %c0_20] : memref<1x128xf32, #tpu.memory_space<vmem>>, vector<1x128xf32>
    %23 = vector.broadcast %22 : vector<1x128xf32> to vector<256x128xf32>
    %24 = arith.addf %21, %23 : vector<256x128xf32>
    %cst_21 = arith.constant 0.000000e+00 : f32
    %25 = vector.broadcast %cst_21 : f32 to vector<256x128xf32>
    %26 = arith.maximumf %24, %25 : vector<256x128xf32>
    %c0_22 = arith.constant 0 : index
    %c0_23 = arith.constant 0 : index
    %27 = vector.load %arg2[%c0_22, %c0_23] : memref<8x256xbf16, #tpu.memory_space<vmem>>, vector<8x256xbf16>
    %28 = arith.truncf %26 : vector<256x128xf32> to vector<256x128xbf16>
    %cst_24 = arith.constant dense<0.000000e+00> : vector<8x128xf32>
    %29 = tpu.matmul %27, %28, %cst_24 {dimension_numbers = #tpu.dot_dimension_numbers<[1], [0], [0], [1], [0, 0, 1, 1], [], []>} : vector<8x256xbf16>, vector<256x128xbf16>, vector<8x128xf32> -> vector<8x128xf32>
    %c0_25 = arith.constant 0 : index
    %c0_26 = arith.constant 0 : index
    %30 = vector.load %arg3[%c0_25, %c0_26] : memref<8x1xf32, #tpu.memory_space<vmem>>, vector<8x1xf32>
    %31 = vector.broadcast %30 : vector<8x1xf32> to vector<8x128xf32>
    %32 = arith.divf %29, %31 : vector<8x128xf32>
    %c0_27 = arith.constant 0 : index
    %c0_28 = arith.constant 0 : index
    %33 = vector.load %arg10[%c0_27, %c0_28] : memref<128x128xf32, #tpu.memory_space<vmem>>, vector<128x128xf32>
    %cst_29 = arith.constant dense<0.000000e+00> : vector<8x128xf32>
    %34 = tpu.matmul %32, %33, %cst_29 {dimension_numbers = #tpu.dot_dimension_numbers<[1], [0], [0], [1], [0, 0, 1, 1], [], []>} : vector<8x128xf32>, vector<128x128xf32>, vector<8x128xf32> -> vector<8x128xf32>
    %c0_30 = arith.constant 0 : index
    %c0_31 = arith.constant 0 : index
    %35 = vector.load %arg11[%c0_30, %c0_31] : memref<1x128xf32, #tpu.memory_space<vmem>>, vector<1x128xf32>
    %36 = vector.broadcast %35 : vector<1x128xf32> to vector<8x128xf32>
    %37 = arith.addf %34, %36 : vector<8x128xf32>
    %cst_32 = arith.constant 0.000000e+00 : f32
    %38 = vector.broadcast %cst_32 : f32 to vector<8x128xf32>
    %39 = arith.maximumf %37, %38 : vector<8x128xf32>
    %c0_33 = arith.constant 0 : index
    %c0_34 = arith.constant 0 : index
    %40 = vector.load %arg12[%c0_33, %c0_34] : memref<128x128xf32, #tpu.memory_space<vmem>>, vector<128x128xf32>
    %cst_35 = arith.constant dense<0.000000e+00> : vector<8x128xf32>
    %41 = tpu.matmul %39, %40, %cst_35 {dimension_numbers = #tpu.dot_dimension_numbers<[1], [0], [0], [1], [0, 0, 1, 1], [], []>} : vector<8x128xf32>, vector<128x128xf32>, vector<8x128xf32> -> vector<8x128xf32>
    %c0_36 = arith.constant 0 : index
    %c0_37 = arith.constant 0 : index
    %42 = vector.load %arg13[%c0_36, %c0_37] : memref<1x128xf32, #tpu.memory_space<vmem>>, vector<1x128xf32>
    %43 = vector.broadcast %42 : vector<1x128xf32> to vector<8x128xf32>
    %44 = arith.addf %41, %43 : vector<8x128xf32>
    %c0_38 = arith.constant 0 : index
    %c0_39 = arith.constant 0 : index
    %45 = vector.load %arg14[%c0_38, %c0_39] : memref<8x128xf32, #tpu.memory_space<vmem>>, vector<8x128xf32>
    tpu.vector_store %arg14[%c0_38, %c0_39], %44 {strides = array<i32>} : memref<8x128xf32, #tpu.memory_space<vmem>>, vector<8x128xf32>,
    return
  }
}

</mosaic_0001>

<llo_original>
// kernel: tpu_custom_call.1
$region0: #{tpu_custom_call.1}
  #allocation0 [shape = 'u32[]', space=smem, size = 0x4, offset = 0x4, fixed_abs, tag = 'smem constant byte address 0x4 - core index']
  #allocation1 [shape = 'u32[144,128]{1,0:T(1,128)}', space=vmem, size = 0x12000, scoped, tag = 'internal scratch']
  %s0 = inlined_call_operand.hbm [shape: bf16[256,256], index: 0, kind: input, shape index: {}]
  %s1 = inlined_call_operand.hbm [shape: bf16[256,128], index: 1, kind: input, shape index: {}]
  %s2 = inlined_call_operand.vmem [shape: bf16[8,256], index: 2, kind: input, shape index: {}]
  %s3 = inlined_call_operand.vmem [shape: f32[8,1], index: 3, kind: input, shape index: {}]
  %s4 = inlined_call_operand.hbm [shape: bf16[128,128], index: 4, kind: input, shape index: {}]
  %s5 = inlined_call_operand.hbm [shape: bf16[128,128], index: 5, kind: input, shape index: {}]
  %s6 = inlined_call_operand.vmem [shape: f32[1,128], index: 6, kind: input, shape index: {}]
  %s7 = inlined_call_operand.hbm [shape: bf16[128,128], index: 7, kind: input, shape index: {}]
  %s8 = inlined_call_operand.hbm [shape: bf16[128,128], index: 8, kind: input, shape index: {}]
  %s9 = inlined_call_operand.vmem [shape: f32[1,128], index: 9, kind: input, shape index: {}]
  %s10 = inlined_call_operand.hbm [shape: f32[128,128], index: 10, kind: input, shape index: {}]
  %s11 = inlined_call_operand.vmem [shape: f32[1,128], index: 11, kind: input, shape index: {}]
  %s12 = inlined_call_operand.hbm [shape: f32[128,128], index: 12, kind: input, shape index: {}]
  %s13 = inlined_call_operand.vmem [shape: f32[1,128], index: 13, kind: input, shape index: {}]
  %s14 = inlined_call_operand.hbm [shape: f32[8,128], index: 14, kind: output, shape index: {}]
  %s15 = sld [smem:[#allocation0]]
  $region98: #{tpu_custom_call.1} parent=0
    _
  %s17 = ssub.s32 1, %s15
  %s18 = scalar_select 0, %s17, %s15
  $region1: #{tpu_custom_call.1} parent=0
    #allocation2 [shape = 'u8[131072]{0}', space=vmem, size = 0x20000, scoped, tag = 'input window, operand 0, single buffered']
    #allocation3 [shape = 's32[1]{0}', space=sflag, size = 0x4, scoped, tag = 'scoped memory for tpu_custom_call.1']
    #allocation4 [shape = 's32[1]{0}', space=sflag, size = 0x4, scoped, tag = 'scoped memory for tpu_custom_call.1']
    #allocation5 [shape = 'u8[65536]{0}', space=vmem, size = 0x10000, scoped, tag = 'input window, operand 1, single buffered']
    #allocation6 [shape = 's32[1]{0}', space=sflag, size = 0x4, scoped, tag = 'scoped memory for tpu_custom_call.1']
    #allocation7 [shape = 'u8[32768]{0}', space=vmem, size = 0x8000, scoped, tag = 'input window, operand 4, single buffered']
    #allocation8 [shape = 'u8[32768]{0}', space=vmem, size = 0x8000, scoped, tag = 'input window, operand 5, single buffered']
    #allocation9 [shape = 's32[1]{0}', space=sflag, size = 0x4, scoped, tag = 'scoped memory for tpu_custom_call.1']
    #allocation10 [shape = 'u8[32768]{0}', space=vmem, size = 0x8000, scoped, tag = 'input window, operand 7, single buffered']
    #allocation11 [shape = 'u8[32768]{0}', space=vmem, size = 0x8000, scoped, tag = 'input window, operand 8, single buffered']
    #allocation12 [shape = 's32[1]{0}', space=sflag, size = 0x4, scoped, tag = 'scoped memory for tpu_custom_call.1']
    #allocation13 [shape = 'u8[65536]{0}', space=vmem, size = 0x10000, scoped, tag = 'input window, operand 10, single buffered']
    #allocation14 [shape = 'u8[65536]{0}', space=vmem, size = 0x10000, scoped, tag = 'input window, operand 12, single buffered']
    #allocation15 [shape = 's32[1]{0}', space=sflag, size = 0x4, scoped, tag = 'scoped memory for tpu_custom_call.1']
    #allocation16 [shape = 'u8[4096]{0}', space=vmem, size = 0x1000, scoped, tag = 'output window, operand 0, single buffered']
    %19 = vsyncpa [#allocation3], 0
    %20 = vsyncpa [#allocation6], 0
    %21 = vsyncpa [#allocation9], 0
    %22 = vsyncpa [#allocation12], 0
    %23 = vsyncpa [#allocation15], 0
    %24 = vsyncpa [#allocation4], 0
    // Predicated region
    $region2: #{tpu_custom_call.1} parent=1 // pred_check
      _
    $region3: #{tpu_custom_call.1} parent=1 // pred_check_branch
      %26 = sbr.rel (0) target = $region5
    $region4: #{tpu_custom_call.1} parent=1 // pred_region
      %s28 = ssub.s32 4096, 4096
      %29 = vsyncadd [#allocation3], %s28
      %s30 = sshll.u32 [#allocation2], 4
      %s31 = int_to_ptr.vmem [resolvable:$true] %s30
      %36 = dma.hbm_to_vmem [thread:$0]  %s0, 4096, %s31, [#allocation3], 128, 128, 8
    $region5: #{tpu_custom_call.1} parent=1 // pred_fallthru
      _
    // Predicated region
    $region6: #{tpu_custom_call.1} parent=1 // pred_check
      _
    $region7: #{tpu_custom_call.1} parent=1 // pred_check_branch
      %38 = sbr.rel (0) target = $region9
    $region8: #{tpu_custom_call.1} parent=1 // pred_region
      %s40 = ssub.s32 2048, 2048
      %41 = vsyncadd [#allocation6], %s40
      %s42 = sshll.u32 [#allocation5], 4
      %s43 = int_to_ptr.vmem [resolvable:$true] %s42
      %48 = dma.hbm_to_vmem [thread:$0]  %s1, 2048, %s43, [#allocation6], 64, 64, 4
    $region9: #{tpu_custom_call.1} parent=1 // pred_fallthru
      _
    // Predicated region
    $region10: #{tpu_custom_call.1} parent=1 // pred_check
      _
    $region11: #{tpu_custom_call.1} parent=1 // pred_check_branch
      %50 = sbr.rel (0) target = $region13
    $region12: #{tpu_custom_call.1} parent=1 // pred_region
      _
    $region13: #{tpu_custom_call.1} parent=1 // pred_fallthru
      _
    // Predicated region
    $region14: #{tpu_custom_call.1} parent=1 // pred_check
      _
    $region15: #{tpu_custom_call.1} parent=1 // pred_check_branch
      %52 = sbr.rel (0) target = $region17
    $region16: #{tpu_custom_call.1} parent=1 // pred_region
      _
    $region17: #{tpu_custom_call.1} parent=1 // pred_fallthru
      _
    // Predicated region
    $region18: #{tpu_custom_call.1} parent=1 // pred_check
      _
    $region19: #{tpu_custom_call.1} parent=1 // pred_check_branch
      %54 = sbr.rel (0) target = $region21
    $region20: #{tpu_custom_call.1} parent=1 // pred_region
      %s56 = ssub.s32 1024, 1024
      %57 = vsyncadd [#allocation6], %s56
      %s58 = sshll.u32 [#allocation7], 4
      %s59 = int_to_ptr.vmem [resolvable:$true] %s58
      %64 = dma.hbm_to_vmem [thread:$0]  %s4, 1024, %s59, [#allocation6], 64, 64, 4
    $region21: #{tpu_custom_call.1} parent=1 // pred_fallthru
      _
    // Predicated region
    $region22: #{tpu_custom_call.1} parent=1 // pred_check
      _
    $region23: #{tpu_custom_call.1} parent=1 // pred_check_branch
      %66 = sbr.rel (0) target = $region25
    $region24: #{tpu_custom_call.1} parent=1 // pred_region
      %s68 = ssub.s32 1024, 1024
      %69 = vsyncadd [#allocation9], %s68
      %s70 = sshll.u32 [#allocation8], 4
      %s71 = int_to_ptr.vmem [resolvable:$true] %s70
      %76 = dma.hbm_to_vmem [thread:$0]  %s5, 1024, %s71, [#allocation9], 64, 64, 4
    $region25: #{tpu_custom_call.1} parent=1 // pred_fallthru
      _
    // Predicated region
    $region26: #{tpu_custom_call.1} parent=1 // pred_check
      _
    $region27: #{tpu_custom_call.1} parent=1 // pred_check_branch
      %78 = sbr.rel (0) target = $region29
    $region28: #{tpu_custom_call.1} parent=1 // pred_region
      _
    $region29: #{tpu_custom_call.1} parent=1 // pred_fallthru
      _
    // Predicated region
    $region30: #{tpu_custom_call.1} parent=1 // pred_check
      _
    $region31: #{tpu_custom_call.1} parent=1 // pred_check_branch
      %80 = sbr.rel (0) target = $region33
    $region32: #{tpu_custom_call.1} parent=1 // pred_region
      %s82 = ssub.s32 1024, 1024
      %83 = vsyncadd [#allocation9], %s82
      %s84 = sshll.u32 [#allocation10], 4
      %s85 = int_to_ptr.vmem [resolvable:$true] %s84
      %90 = dma.hbm_to_vmem [thread:$0]  %s7, 1024, %s85, [#allocation9], 64, 64, 4
    $region33: #{tpu_custom_call.1} parent=1 // pred_fallthru
      _
    // Predicated region
    $region34: #{tpu_custom_call.1} parent=1 // pred_check
      _
    $region35: #{tpu_custom_call.1} parent=1 // pred_check_branch
      %92 = sbr.rel (0) target = $region37
    $region36: #{tpu_custom_call.1} parent=1 // pred_region
      %s94 = ssub.s32 1024, 1024
      %95 = vsyncadd [#allocation12], %s94
      %s96 = sshll.u32 [#allocation11], 4
      %s97 = int_to_ptr.vmem [resolvable:$true] %s96
      %102 = dma.hbm_to_vmem [thread:$0]  %s8, 1024, %s97, [#allocation12], 64, 64, 4
    $region37: #{tpu_custom_call.1} parent=1 // pred_fallthru
      _
    // Predicated region
    $region38: #{tpu_custom_call.1} parent=1 // pred_check
      _
    $region39: #{tpu_custom_call.1} parent=1 // pred_check_branch
      %104 = sbr.rel (0) target = $region41
    $region40: #{tpu_custom_call.1} parent=1 // pred_region
      _
    $region41: #{tpu_custom_call.1} parent=1 // pred_fallthru
      _
    // Predicated region
    $region42: #{tpu_custom_call.1} parent=1 // pred_check
      _
    $region43: #{tpu_custom_call.1} parent=1 // pred_check_branch
      %106 = sbr.rel (0) target = $region45
    $region44: #{tpu_custom_call.1} parent=1 // pred_region
      %s108 = ssub.s32 2048, 2048
      %109 = vsyncadd [#allocation12], %s108
      %s110 = sshll.u32 [#allocation13], 4
      %s111 = int_to_ptr.vmem [resolvable:$true] %s110
      %116 = dma.hbm_to_vmem [thread:$0]  %s10, 2048, %s111, [#allocation12], 128, 128, 8
    $region45: #{tpu_custom_call.1} parent=1 // pred_fallthru
      _
    // Predicated region
    $region46: #{tpu_custom_call.1} parent=1 // pred_check
      _
    $region47: #{tpu_custom_call.1} parent=1 // pred_check_branch
      %118 = sbr.rel (0) target = $region49
    $region48: #{tpu_custom_call.1} parent=1 // pred_region
      _
    $region49: #{tpu_custom_call.1} parent=1 // pred_fallthru
      _
    // Predicated region
    $region50: #{tpu_custom_call.1} parent=1 // pred_check
      _
    $region51: #{tpu_custom_call.1} parent=1 // pred_check_branch
      %120 = sbr.rel (0) target = $region53
    $region52: #{tpu_custom_call.1} parent=1 // pred_region
      %s122 = ssub.s32 2048, 2048
      %123 = vsyncadd [#allocation15], %s122
      %s124 = sshll.u32 [#allocation14], 4
      %s125 = int_to_ptr.vmem [resolvable:$true] %s124
      %130 = dma.hbm_to_vmem [thread:$0]  %s12, 2048, %s125, [#allocation15], 128, 128, 8
    $region53: #{tpu_custom_call.1} parent=1 // pred_fallthru
      _
    // Predicated region
    $region54: #{tpu_custom_call.1} parent=1 // pred_check
      _
    $region55: #{tpu_custom_call.1} parent=1 // pred_check_branch
      %132 = sbr.rel (0) target = $region57
    $region56: #{tpu_custom_call.1} parent=1 // pred_region
      _
    $region57: #{tpu_custom_call.1} parent=1 // pred_fallthru
      _
    // Predicated region
    $region58: #{tpu_custom_call.1} parent=1 // pred_check
      _
    $region59: #{tpu_custom_call.1} parent=1 // pred_check_branch
      %134 = sbr.rel (0) target = $region61
    $region60: #{tpu_custom_call.1} parent=1 // pred_region
      %135 = dma.done [#allocation3], 4096
    $region61: #{tpu_custom_call.1} parent=1 // pred_fallthru
      _
    // Predicated region
    $region62: #{tpu_custom_call.1} parent=1 // pred_check
      _
    $region63: #{tpu_custom_call.1} parent=1 // pred_check_branch
      %137 = sbr.rel (0) target = $region65
    $region64: #{tpu_custom_call.1} parent=1 // pred_region
      %138 = dma.done [#allocation6], 2048
    $region65: #{tpu_custom_call.1} parent=1 // pred_fallthru
      _
    // Predicated region
    $region66: #{tpu_custom_call.1} parent=1 // pred_check
      _
    $region67: #{tpu_custom_call.1} parent=1 // pred_check_branch
      %140 = sbr.rel (0) target = $region69
    $region68: #{tpu_custom_call.1} parent=1 // pred_region
      %141 = dma.done [#allocation6], 1024
    $region69: #{tpu_custom_call.1} parent=1 // pred_fallthru
      _
    // Predicated region
    $region70: #{tpu_custom_call.1} parent=1 // pred_check
      _
    $region71: #{tpu_custom_call.1} parent=1 // pred_check_branch
      %143 = sbr.rel (0) target = $region73
    $region72: #{tpu_custom_call.1} parent=1 // pred_region
      %144 = dma.done [#allocation9], 1024
    $region73: #{tpu_custom_call.1} parent=1 // pred_fallthru
      _
    // Predicated region
    $region74: #{tpu_custom_call.1} parent=1 // pred_check
      _
    $region75: #{tpu_custom_call.1} parent=1 // pred_check_branch
      %146 = sbr.rel (0) target = $region77
    $region76: #{tpu_custom_call.1} parent=1 // pred_region
      %147 = dma.done [#allocation9], 1024
    $region77: #{tpu_custom_call.1} parent=1 // pred_fallthru
      _
    // Predicated region
    $region78: #{tpu_custom_call.1} parent=1 // pred_check
      _
    $region79: #{tpu_custom_call.1} parent=1 // pred_check_branch
      %149 = sbr.rel (0) target = $region81
    $region80: #{tpu_custom_call.1} parent=1 // pred_region
      %150 = dma.done [#allocation12], 1024
    $region81: #{tpu_custom_call.1} parent=1 // pred_fallthru
      _
    // Predicated region
    $region82: #{tpu_custom_call.1} parent=1 // pred_check
      _
    $region83: #{tpu_custom_call.1} parent=1 // pred_check_branch
      %152 = sbr.rel (0) target = $region85
    $region84: #{tpu_custom_call.1} parent=1 // pred_region
      %153 = dma.done [#allocation12], 2048
    $region85: #{tpu_custom_call.1} parent=1 // pred_fallthru
      _
    // Predicated region
    $region86: #{tpu_custom_call.1} parent=1 // pred_check
      _
    $region87: #{tpu_custom_call.1} parent=1 // pred_check_branch
      %155 = sbr.rel (0) target = $region89
    $region88: #{tpu_custom_call.1} parent=1 // pred_region
      %156 = dma.done [#allocation15], 2048
    $region89: #{tpu_custom_call.1} parent=1 // pred_fallthru
      _
    %v158 = vld [vmem:[#allocation2] sm:$0xff]
    %v159 = vld [vmem:[#allocation2 + $0x8] sm:$0xff]
    %v160 = vld [vmem:[#allocation2 + $0x10] sm:$0xff]
    %v161 = vld [vmem:[#allocation2 + $0x18] sm:$0xff]
    %v162 = vld [vmem:[#allocation2 + $0x20] sm:$0xff]
    %v163 = vld [vmem:[#allocation2 + $0x28] sm:$0xff]
    %v164 = vld [vmem:[#allocation2 + $0x30] sm:$0xff]
    %v165 = vld [vmem:[#allocation2 + $0x38] sm:$0xff]
    %v166 = vld [vmem:[#allocation2 + $0x40] sm:$0xff]
    %v167 = vld [vmem:[#allocation2 + $0x48] sm:$0xff]
    %v168 = vld [vmem:[#allocation2 + $0x50] sm:$0xff]
    %v169 = vld [vmem:[#allocation2 + $0x58] sm:$0xff]
    %v170 = vld [vmem:[#allocation2 + $0x60] sm:$0xff]
    %v171 = vld [vmem:[#allocation2 + $0x68] sm:$0xff]
    %v172 = vld [vmem:[#allocation2 + $0x70] sm:$0xff]
    %v173 = vld [vmem:[#allocation2 + $0x78] sm:$0xff]
    %v174 = vld [vmem:[#allocation2 + $0x80] sm:$0xff]
    %v175 = vld [vmem:[#allocation2 + $0x88] sm:$0xff]
    %v176 = vld [vmem:[#allocation2 + $0x90] sm:$0xff]
    %v177 = vld [vmem:[#allocation2 + $0x98] sm:$0xff]
    %v178 = vld [vmem:[#allocation2 + $0xa0] sm:$0xff]
    %v179 = vld [vmem:[#allocation2 + $0xa8] sm:$0xff]
    %v180 = vld [vmem:[#allocation2 + $0xb0] sm:$0xff]
    %v181 = vld [vmem:[#allocation2 + $0xb8] sm:$0xff]
    %v182 = vld [vmem:[#allocation2 + $0xc0] sm:$0xff]
    %v183 = vld [vmem:[#allocation2 + $0xc8] sm:$0xff]
    %v184 = vld [vmem:[#allocation2 + $0xd0] sm:$0xff]
    %v185 = vld [vmem:[#allocation2 + $0xd8] sm:$0xff]
    %v186 = vld [vmem:[#allocation2 + $0xe0] sm:$0xff]
    %v187 = vld [vmem:[#allocation2 + $0xe8] sm:$0xff]
    %v188 = vld [vmem:[#allocation2 + $0xf0] sm:$0xff]
    %v189 = vld [vmem:[#allocation2 + $0xf8] sm:$0xff]
    %v190 = vld [vmem:[#allocation5] sm:$0xf]
    %v191 = vld [vmem:[#allocation5 + $0x4] sm:$0xf]
    %v192 = vld [vmem:[#allocation5 + $0x8] sm:$0xf]
    %v193 = vld [vmem:[#allocation5 + $0xc] sm:$0xf]
    %v194 = vld [vmem:[#allocation5 + $0x10] sm:$0xf]
    %v195 = vld [vmem:[#allocation5 + $0x14] sm:$0xf]
    %v196 = vld [vmem:[#allocation5 + $0x18] sm:$0xf]
    %v197 = vld [vmem:[#allocation5 + $0x1c] sm:$0xf]
    %v198 = vld [vmem:[#allocation5 + $0x20] sm:$0xf]
    %v199 = vld [vmem:[#allocation5 + $0x24] sm:$0xf]
    %v200 = vld [vmem:[#allocation5 + $0x28] sm:$0xf]
    %v201 = vld [vmem:[#allocation5 + $0x2c] sm:$0xf]
    %v202 = vld [vmem:[#allocation5 + $0x30] sm:$0xf]
    %v203 = vld [vmem:[#allocation5 + $0x34] sm:$0xf]
    %v204 = vld [vmem:[#allocation5 + $0x38] sm:$0xf]
    %v205 = vld [vmem:[#allocation5 + $0x3c] sm:$0xf]
    %v206 = vld [vmem:[#allocation5 + $0x40] sm:$0xf]
    %v207 = vld [vmem:[#allocation5 + $0x44] sm:$0xf]
    %v208 = vld [vmem:[#allocation5 + $0x48] sm:$0xf]
    %v209 = vld [vmem:[#allocation5 + $0x4c] sm:$0xf]
    %v210 = vld [vmem:[#allocation5 + $0x50] sm:$0xf]
    %v211 = vld [vmem:[#allocation5 + $0x54] sm:$0xf]
    %v212 = vld [vmem:[#allocation5 + $0x58] sm:$0xf]
    %v213 = vld [vmem:[#allocation5 + $0x5c] sm:$0xf]
    %v214 = vld [vmem:[#allocation5 + $0x60] sm:$0xf]
    %v215 = vld [vmem:[#allocation5 + $0x64] sm:$0xf]
    %v216 = vld [vmem:[#allocation5 + $0x68] sm:$0xf]
    %v217 = vld [vmem:[#allocation5 + $0x6c] sm:$0xf]
    %v218 = vld [vmem:[#allocation5 + $0x70] sm:$0xf]
    %v219 = vld [vmem:[#allocation5 + $0x74] sm:$0xf]
    %v220 = vld [vmem:[#allocation5 + $0x78] sm:$0xf]
    %v221 = vld [vmem:[#allocation5 + $0x7c] sm:$0xf]
    %v254 = vunpack.c.l.b16 %v158
    %v255 = vunpack.c.h.b16 %v158
    %v256 = vunpack.c.l.b16 %v159
    %v257 = vunpack.c.h.b16 %v159
    %v258 = vunpack.c.l.b16 %v160
    %v259 = vunpack.c.h.b16 %v160
    %v260 = vunpack.c.l.b16 %v161
    %v261 = vunpack.c.h.b16 %v161
    %v262 = vunpack.c.l.b16 %v162
    %v263 = vunpack.c.h.b16 %v162
    %v264 = vunpack.c.l.b16 %v163
    %v265 = vunpack.c.h.b16 %v163
    %v266 = vunpack.c.l.b16 %v164
    %v267 = vunpack.c.h.b16 %v164
    %v268 = vunpack.c.l.b16 %v165
    %v269 = vunpack.c.h.b16 %v165
    %v270 = vunpack.c.l.b16 %v166
    %v271 = vunpack.c.h.b16 %v166
    %v272 = vunpack.c.l.b16 %v167
    %v273 = vunpack.c.h.b16 %v167
    %v274 = vunpack.c.l.b16 %v168
    %v275 = vunpack.c.h.b16 %v168
    %v276 = vunpack.c.l.b16 %v169
    %v277 = vunpack.c.h.b16 %v169
    %v278 = vunpack.c.l.b16 %v170
    %v279 = vunpack.c.h.b16 %v170
    %v280 = vunpack.c.l.b16 %v171
    %v281 = vunpack.c.h.b16 %v171
    %v282 = vunpack.c.l.b16 %v172
    %v283 = vunpack.c.h.b16 %v172
    %v284 = vunpack.c.l.b16 %v173
    %v285 = vunpack.c.h.b16 %v173
    %v286 = vunpack.c.l.b16 %v174
    %v287 = vunpack.c.h.b16 %v174
    %v288 = vunpack.c.l.b16 %v175
    %v289 = vunpack.c.h.b16 %v175
    %v290 = vunpack.c.l.b16 %v176
    %v291 = vunpack.c.h.b16 %v176
    %v292 = vunpack.c.l.b16 %v177
    %v293 = vunpack.c.h.b16 %v177
    %v294 = vunpack.c.l.b16 %v178
    %v295 = vunpack.c.h.b16 %v178
    %v296 = vunpack.c.l.b16 %v179
    %v297 = vunpack.c.h.b16 %v179
    %v298 = vunpack.c.l.b16 %v180
    %v299 = vunpack.c.h.b16 %v180
    %v300 = vunpack.c.l.b16 %v181
    %v301 = vunpack.c.h.b16 %v181
    %v302 = vunpack.c.l.b16 %v182
    %v303 = vunpack.c.h.b16 %v182
    %v304 = vunpack.c.l.b16 %v183
    %v305 = vunpack.c.h.b16 %v183
    %v306 = vunpack.c.l.b16 %v184
    %v307 = vunpack.c.h.b16 %v184
    %v308 = vunpack.c.l.b16 %v185
    %v309 = vunpack.c.h.b16 %v185
    %v310 = vunpack.c.l.b16 %v186
    %v311 = vunpack.c.h.b16 %v186
    %v312 = vunpack.c.l.b16 %v187
    %v313 = vunpack.c.h.b16 %v187
    %v314 = vunpack.c.l.b16 %v188
    %v315 = vunpack.c.h.b16 %v188
    %v316 = vunpack.c.l.b16 %v189
    %v317 = vunpack.c.h.b16 %v189
    %v318 = vpack.c.b16 %v256, %v254
    %v319 = vpack.c.b16 %v257, %v255
    %v320 = vpack.c.b16 %v260, %v258
    %v321 = vpack.c.b16 %v261, %v259
    %v322 = vpack.c.b16 %v264, %v262
    %v323 = vpack.c.b16 %v265, %v263
    %v324 = vpack.c.b16 %v268, %v266
    %v325 = vpack.c.b16 %v269, %v267
    %v326 = vpack.c.b16 %v272, %v270
    %v327 = vpack.c.b16 %v273, %v271
    %v328 = vpack.c.b16 %v276, %v274
    %v329 = vpack.c.b16 %v277, %v275
    %v330 = vpack.c.b16 %v280, %v278
    %v331 = vpack.c.b16 %v281, %v279
    %v332 = vpack.c.b16 %v284, %v282
    %v333 = vpack.c.b16 %v285, %v283
    %v334 = vpack.c.b16 %v288, %v286
    %v335 = vpack.c.b16 %v289, %v287
    %v336 = vpack.c.b16 %v292, %v290
    %v337 = vpack.c.b16 %v293, %v291
    %v338 = vpack.c.b16 %v296, %v294
    %v339 = vpack.c.b16 %v297, %v295
    %v340 = vpack.c.b16 %v300, %v298
    %v341 = vpack.c.b16 %v301, %v299
    %v342 = vpack.c.b16 %v304, %v302
    %v343 = vpack.c.b16 %v305, %v303
    %v344 = vpack.c.b16 %v308, %v306
    %v345 = vpack.c.b16 %v309, %v307
    %v346 = vpack.c.b16 %v312, %v310
    %v347 = vpack.c.b16 %v313, %v311
    %v348 = vpack.c.b16 %v316, %v314
    %v349 = vpack.c.b16 %v317, %v315
    %v414 = vunpack.c.l.b16 %v190
    %v415 = vunpack.c.l.b16 %v191
    %v416 = vunpack.c.l.b16 %v192
    %v417 = vunpack.c.l.b16 %v193
    %v418 = vunpack.c.l.b16 %v194
    %v419 = vunpack.c.l.b16 %v195
    %v420 = vunpack.c.l.b16 %v196
    %v421 = vunpack.c.l.b16 %v197
    %v422 = vunpack.c.l.b16 %v198
    %v423 = vunpack.c.l.b16 %v199
    %v424 = vunpack.c.l.b16 %v200
    %v425 = vunpack.c.l.b16 %v201
    %v426 = vunpack.c.l.b16 %v202
    %v427 = vunpack.c.l.b16 %v203
    %v428 = vunpack.c.l.b16 %v204
    %v429 = vunpack.c.l.b16 %v205
    %v430 = vunpack.c.l.b16 %v206
    %v431 = vunpack.c.l.b16 %v207
    %v432 = vunpack.c.l.b16 %v208
    %v433 = vunpack.c.l.b16 %v209
    %v434 = vunpack.c.l.b16 %v210
    %v435 = vunpack.c.l.b16 %v211
    %v436 = vunpack.c.l.b16 %v212
    %v437 = vunpack.c.l.b16 %v213
    %v438 = vunpack.c.l.b16 %v214
    %v439 = vunpack.c.l.b16 %v215
    %v440 = vunpack.c.l.b16 %v216
    %v441 = vunpack.c.l.b16 %v217
    %v442 = vunpack.c.l.b16 %v218
    %v443 = vunpack.c.l.b16 %v219
    %v444 = vunpack.c.l.b16 %v220
    %v445 = vunpack.c.l.b16 %v221
    %v446 = vpack.c.b16 %v415, %v414
    %v447 = vpack.c.b16 %v417, %v416
    %v448 = vpack.c.b16 %v419, %v418
    %v449 = vpack.c.b16 %v421, %v420
    %v450 = vpack.c.b16 %v423, %v422
    %v451 = vpack.c.b16 %v425, %v424
    %v452 = vpack.c.b16 %v427, %v426
    %v453 = vpack.c.b16 %v429, %v428
    %v454 = vpack.c.b16 %v431, %v430
    %v455 = vpack.c.b16 %v433, %v432
    %v456 = vpack.c.b16 %v435, %v434
    %v457 = vpack.c.b16 %v437, %v436
    %v458 = vpack.c.b16 %v439, %v438
    %v459 = vpack.c.b16 %v441, %v440
    %v460 = vpack.c.b16 %v443, %v442
    %v461 = vpack.c.b16 %v445, %v444
    %478 = vmatprep.subr.bf16.mxu0 0
    %479 = vmatpush1.bf16.msra.mxu0 %v446
    %480 = vmatprep.subr.bf16.mxu0 0
    %481 = vmatpush1.bf16.msra.mxu0 %v447
    %482 = vmatprep.subr.bf16.mxu0 0
    %483 = vmatpush1.bf16.msra.mxu0 %v448
    %484 = vmatprep.subr.bf16.mxu0 0
    %485 = vmatpush1.bf16.msra.mxu0 %v449
    %486 = vmatprep.subr.bf16.mxu0 0
    %487 = vmatpush1.bf16.msra.mxu0 %v450
    %488 = vmatprep.subr.bf16.mxu0 0
    %489 = vmatpush1.bf16.msra.mxu0 %v451
    %490 = vmatprep.subr.bf16.mxu0 0
    %491 = vmatpush1.bf16.msra.mxu0 %v452
    %492 = vmatprep.subr.bf16.mxu0 0
    %493 = vmatpush1.bf16.msra.mxu0 %v453
    %494 = vmatprep.subr.bf16.mxu0 0
    %495 = vmatpush1.bf16.msra.mxu0 %v454
    %496 = vmatprep.subr.bf16.mxu0 0
    %497 = vmatpush1.bf16.msra.mxu0 %v455
    %498 = vmatprep.subr.bf16.mxu0 0
    %499 = vmatpush1.bf16.msra.mxu0 %v456
    %500 = vmatprep.subr.bf16.mxu0 0
    %501 = vmatpush1.bf16.msra.mxu0 %v457
    %502 = vmatprep.subr.bf16.mxu0 0
    %503 = vmatpush1.bf16.msra.mxu0 %v458
    %504 = vmatprep.subr.bf16.mxu0 0
    %505 = vmatpush1.bf16.msra.mxu0 %v459
    %506 = vmatprep.subr.bf16.mxu0 0
    %507 = vmatpush1.bf16.msra.mxu0 %v460
    %508 = vmatprep.subr.bf16.mxu0 0
    %509 = vmatpush1.bf16.msra.mxu0 %v461
    %510 = vmatprep.mubr.bf16.mxu0 %v319
    %511 = vmatmul.mubr.bf16.gmra.mrb[0].mxu0 %v318
    %v512 = vpop.f32.mrb[0].mxu0
    %v513 = vadd.f32 0.0, %v512
    %v514 = vpop.f32.mrb[0].mxu0
    %v515 = vpop.f32.mrb[0].mxu0
    %v516 = vadd.f32 0.0, %v515
    %v517 = vpop.f32.mrb[0].mxu0
    %518 = vmatprep.mubr.bf16.mxu0 %v321
    %519 = vmatmul.mubr.bf16.gmra.mrb[0].mxu0 %v320
    %v520 = vpop.f32.mrb[0].mxu0
    %v521 = vadd.f32 0.0, %v520
    %v522 = vpop.f32.mrb[0].mxu0
    %v523 = vpop.f32.mrb[0].mxu0
    %v524 = vadd.f32 0.0, %v523
    %v525 = vpop.f32.mrb[0].mxu0
    %526 = vmatprep.mubr.bf16.mxu0 %v323
    %527 = vmatmul.mubr.bf16.gmra.mrb[0].mxu0 %v322
    %v528 = vpop.f32.mrb[0].mxu0
    %v529 = vadd.f32 0.0, %v528
    %v530 = vpop.f32.mrb[0].mxu0
    %v531 = vpop.f32.mrb[0].mxu0
    %v532 = vadd.f32 0.0, %v531
    %v533 = vpop.f32.mrb[0].mxu0
    %534 = vmatprep.mubr.bf16.mxu0 %v325
    %535 = vmatmul.mubr.bf16.gmra.mrb[0].mxu0 %v324
    %v536 = vpop.f32.mrb[0].mxu0
    %v537 = vadd.f32 0.0, %v536
    %v538 = vpop.f32.mrb[0].mxu0
    %v539 = vpop.f32.mrb[0].mxu0
    %v540 = vadd.f32 0.0, %v539
    %v541 = vpop.f32.mrb[0].mxu0
    %542 = vmatprep.mubr.bf16.mxu0 %v327
    %543 = vmatmul.mubr.bf16.gmra.mrb[0].mxu0 %v326
    %v544 = vpop.f32.mrb[0].mxu0
    %v545 = vadd.f32 0.0, %v544
    %v546 = vpop.f32.mrb[0].mxu0
    %v547 = vpop.f32.mrb[0].mxu0
    %v548 = vadd.f32 0.0, %v547
    %v549 = vpop.f32.mrb[0].mxu0
    %550 = vmatprep.mubr.bf16.mxu0 %v329
    %551 = vmatmul.mubr.bf16.gmra.mrb[0].mxu0 %v328
    %v552 = vpop.f32.mrb[0].mxu0
    %v553 = vadd.f32 0.0, %v552
    %v554 = vpop.f32.mrb[0].mxu0
    %v555 = vpop.f32.mrb[0].mxu0
    %v556 = vadd.f32 0.0, %v555
    %v557 = vpop.f32.mrb[0].mxu0
    %558 = vmatprep.mubr.bf16.mxu0 %v331
    %559 = vmatmul.mubr.bf16.gmra.mrb[0].mxu0 %v330
    %v560 = vpop.f32.mrb[0].mxu0
    %v561 = vadd.f32 0.0, %v560
    %v562 = vpop.f32.mrb[0].mxu0
    %v563 = vpop.f32.mrb[0].mxu0
    %v564 = vadd.f32 0.0, %v563
    %v565 = vpop.f32.mrb[0].mxu0
    %566 = vmatprep.mubr.bf16.mxu0 %v333
    %567 = vmatmul.mubr.bf16.gmra.mrb[0].mxu0 %v332
    %v568 = vpop.f32.mrb[0].mxu0
    %v569 = vadd.f32 0.0, %v568
    %v570 = vpop.f32.mrb[0].mxu0
    %v571 = vpop.f32.mrb[0].mxu0
    %v572 = vadd.f32 0.0, %v571
    %v573 = vpop.f32.mrb[0].mxu0
    %574 = vmatprep.mubr.bf16.mxu0 %v335
    %575 = vmatmul.mubr.bf16.gmra.mrb[0].mxu0 %v334
    %v576 = vpop.f32.mrb[0].mxu0
    %v577 = vadd.f32 0.0, %v576
    %v578 = vpop.f32.mrb[0].mxu0
    %v579 = vpop.f32.mrb[0].mxu0
    %v580 = vadd.f32 0.0, %v579
    %v581 = vpop.f32.mrb[0].mxu0
    %582 = vmatprep.mubr.bf16.mxu0 %v337
    %583 = vmatmul.mubr.bf16.gmra.mrb[0].mxu0 %v336
    %v584 = vpop.f32.mrb[0].mxu0
    %v585 = vadd.f32 0.0, %v584
    %v586 = vpop.f32.mrb[0].mxu0
    %v587 = vpop.f32.mrb[0].mxu0
    %v588 = vadd.f32 0.0, %v587
    %v589 = vpop.f32.mrb[0].mxu0
    %590 = vmatprep.mubr.bf16.mxu0 %v339
    %591 = vmatmul.mubr.bf16.gmra.mrb[0].mxu0 %v338
    %v592 = vpop.f32.mrb[0].mxu0
    %v593 = vadd.f32 0.0, %v592
    %v594 = vpop.f32.mrb[0].mxu0
    %v595 = vpop.f32.mrb[0].mxu0
    %v596 = vadd.f32 0.0, %v595
    %v597 = vpop.f32.mrb[0].mxu0
    %598 = vmatprep.mubr.bf16.mxu0 %v341
    %599 = vmatmul.mubr.bf16.gmra.mrb[0].mxu0 %v340
    %v600 = vpop.f32.mrb[0].mxu0
    %v601 = vadd.f32 0.0, %v600
    %v602 = vpop.f32.mrb[0].mxu0
    %v603 = vpop.f32.mrb[0].mxu0
    %v604 = vadd.f32 0.0, %v603
    %v605 = vpop.f32.mrb[0].mxu0
    %606 = vmatprep.mubr.bf16.mxu0 %v343
    %607 = vmatmul.mubr.bf16.gmra.mrb[0].mxu0 %v342
    %v608 = vpop.f32.mrb[0].mxu0
    %v609 = vadd.f32 0.0, %v608
    %v610 = vpop.f32.mrb[0].mxu0
    %v611 = vpop.f32.mrb[0].mxu0
    %v612 = vadd.f32 0.0, %v611
    %v613 = vpop.f32.mrb[0].mxu0
    %614 = vmatprep.mubr.bf16.mxu0 %v345
    %615 = vmatmul.mubr.bf16.gmra.mrb[0].mxu0 %v344
    %v616 = vpop.f32.mrb[0].mxu0
    %v617 = vadd.f32 0.0, %v616
    %v618 = vpop.f32.mrb[0].mxu0
    %v619 = vpop.f32.mrb[0].mxu0
    %v620 = vadd.f32 0.0, %v619
    %v621 = vpop.f32.mrb[0].mxu0
    %622 = vmatprep.mubr.bf16.mxu0 %v347
    %623 = vmatmul.mubr.bf16.gmra.mrb[0].mxu0 %v346
    %v624 = vpop.f32.mrb[0].mxu0
    %v625 = vadd.f32 0.0, %v624
    %v626 = vpop.f32.mrb[0].mxu0
    %v627 = vpop.f32.mrb[0].mxu0
    %v628 = vadd.f32 0.0, %v627
    %v629 = vpop.f32.mrb[0].mxu0
    %630 = vmatprep.mubr.bf16.mxu0 %v349
    %631 = vmatmul.mubr.bf16.gmra.mrb[0].mxu0 %v348
    %v632 = vpop.f32.mrb[0].mxu0
    %v633 = vadd.f32 0.0, %v632
    %v634 = vpop.f32.mrb[0].mxu0
    %v635 = vpop.f32.mrb[0].mxu0
    %v636 = vadd.f32 0.0, %v635
    %v637 = vpop.f32.mrb[0].mxu0
    %638 = vdwg.mxu0
    %v639 = vpack.c.bf16 %v516, %v513
    %v640 = vpack.c.bf16 %v524, %v521
    %v641 = vpack.c.bf16 %v532, %v529
    %v642 = vpack.c.bf16 %v540, %v537
    %v643 = vpack.c.bf16 %v548, %v545
    %v644 = vpack.c.bf16 %v556, %v553
    %v645 = vpack.c.bf16 %v564, %v561
    %v646 = vpack.c.bf16 %v572, %v569
    %v647 = vpack.c.bf16 %v580, %v577
    %v648 = vpack.c.bf16 %v588, %v585
    %v649 = vpack.c.bf16 %v596, %v593
    %v650 = vpack.c.bf16 %v604, %v601
    %v651 = vpack.c.bf16 %v612, %v609
    %v652 = vpack.c.bf16 %v620, %v617
    %v653 = vpack.c.bf16 %v628, %v625
    %v654 = vpack.c.bf16 %v636, %v633
    %v655 = vld [vmem:[#allocation7] sm:$0xf]
    %v656 = vld [vmem:[#allocation7 + $0x4] sm:$0xf]
    %v657 = vld [vmem:[#allocation7 + $0x8] sm:$0xf]
    %v658 = vld [vmem:[#allocation7 + $0xc] sm:$0xf]
    %v659 = vld [vmem:[#allocation7 + $0x10] sm:$0xf]
    %v660 = vld [vmem:[#allocation7 + $0x14] sm:$0xf]
    %v661 = vld [vmem:[#allocation7 + $0x18] sm:$0xf]
    %v662 = vld [vmem:[#allocation7 + $0x1c] sm:$0xf]
    %v663 = vld [vmem:[#allocation7 + $0x20] sm:$0xf]
    %v664 = vld [vmem:[#allocation7 + $0x24] sm:$0xf]
    %v665 = vld [vmem:[#allocation7 + $0x28] sm:$0xf]
    %v666 = vld [vmem:[#allocation7 + $0x2c] sm:$0xf]
    %v667 = vld [vmem:[#allocation7 + $0x30] sm:$0xf]
    %v668 = vld [vmem:[#allocation7 + $0x34] sm:$0xf]
    %v669 = vld [vmem:[#allocation7 + $0x38] sm:$0xf]
    %v670 = vld [vmem:[#allocation7 + $0x3c] sm:$0xf]
    %v671 = vld [vmem:[#allocation8] sm:$0xf]
    %v672 = vld [vmem:[#allocation8 + $0x4] sm:$0xf]
    %v673 = vld [vmem:[#allocation8 + $0x8] sm:$0xf]
    %v674 = vld [vmem:[#allocation8 + $0xc] sm:$0xf]
    %v675 = vld [vmem:[#allocation8 + $0x10] sm:$0xf]
    %v676 = vld [vmem:[#allocation8 + $0x14] sm:$0xf]
    %v677 = vld [vmem:[#allocation8 + $0x18] sm:$0xf]
    %v678 = vld [vmem:[#allocation8 + $0x1c] sm:$0xf]
    %v679 = vld [vmem:[#allocation8 + $0x20] sm:$0xf]
    %v680 = vld [vmem:[#allocation8 + $0x24] sm:$0xf]
    %v681 = vld [vmem:[#allocation8 + $0x28] sm:$0xf]
    %v682 = vld [vmem:[#allocation8 + $0x2c] sm:$0xf]
    %v683 = vld [vmem:[#allocation8 + $0x30] sm:$0xf]
    %v684 = vld [vmem:[#allocation8 + $0x34] sm:$0xf]
    %v685 = vld [vmem:[#allocation8 + $0x38] sm:$0xf]
    %v686 = vld [vmem:[#allocation8 + $0x3c] sm:$0xf]
    %v703 = vunpack.c.l.b16 %v671
    %v704 = vunpack.c.l.b16 %v672
    %v705 = vunpack.c.l.b16 %v673
    %v706 = vunpack.c.l.b16 %v674
    %v707 = vunpack.c.l.b16 %v675
    %v708 = vunpack.c.l.b16 %v676
    %v709 = vunpack.c.l.b16 %v677
    %v710 = vunpack.c.l.b16 %v678
    %v711 = vunpack.c.l.b16 %v679
    %v712 = vunpack.c.l.b16 %v680
    %v713 = vunpack.c.l.b16 %v681
    %v714 = vunpack.c.l.b16 %v682
    %v715 = vunpack.c.l.b16 %v683
    %v716 = vunpack.c.l.b16 %v684
    %v717 = vunpack.c.l.b16 %v685
    %v718 = vunpack.c.l.b16 %v686
    %v719 = vpack.c.b16 %v704, %v703
    %v720 = vpack.c.b16 %v706, %v705
    %v721 = vpack.c.b16 %v708, %v707
    %v722 = vpack.c.b16 %v710, %v709
    %v723 = vpack.c.b16 %v712, %v711
    %v724 = vpack.c.b16 %v714, %v713
    %v725 = vpack.c.b16 %v716, %v715
    %v726 = vpack.c.b16 %v718, %v717
    %735 = vmatprep.subr.bf16.mxu0 0
    %736 = vmatpush1.bf16.msra.mxu0 %v719
    %737 = vmatprep.subr.bf16.mxu0 0
    %738 = vmatpush1.bf16.msra.mxu0 %v720
    %739 = vmatprep.subr.bf16.mxu0 0
    %740 = vmatpush1.bf16.msra.mxu0 %v721
    %741 = vmatprep.subr.bf16.mxu0 0
    %742 = vmatpush1.bf16.msra.mxu0 %v722
    %743 = vmatprep.subr.bf16.mxu0 0
    %744 = vmatpush1.bf16.msra.mxu0 %v723
    %745 = vmatprep.subr.bf16.mxu0 0
    %746 = vmatpush1.bf16.msra.mxu0 %v724
    %747 = vmatprep.subr.bf16.mxu0 0
    %748 = vmatpush1.bf16.msra.mxu0 %v725
    %749 = vmatprep.subr.bf16.mxu0 0
    %750 = vmatpush1.bf16.msra.mxu0 %v726
    %751 = vmatprep.subr.bf16.mxu0 0
    %752 = vmatpush1.bf16.msra.mxu0 0
    %753 = vmatprep.subr.bf16.mxu0 0
    %754 = vmatpush1.bf16.msra.mxu0 0
    %755 = vmatprep.subr.bf16.mxu0 0
    %756 = vmatpush1.bf16.msra.mxu0 0
    %757 = vmatprep.subr.bf16.mxu0 0
    %758 = vmatpush1.bf16.msra.mxu0 0
    %759 = vmatprep.subr.bf16.mxu0 0
    %760 = vmatpush1.bf16.msra.mxu0 0
    %761 = vmatprep.subr.bf16.mxu0 0
    %762 = vmatpush1.bf16.msra.mxu0 0
    %763 = vmatprep.subr.bf16.mxu0 0
    %764 = vmatpush1.bf16.msra.mxu0 0
    %765 = vmatprep.subr.bf16.mxu0 0
    %766 = vmatpush1.bf16.msra.mxu0 0
    %767 = vmatprep.mubr.bf16.mxu0 0
    %768 = vmatmul.mubr.bf16.gmra.mrb[0].mxu0 %v446
    %v769 = vpop.f32.mrb[0].mxu0
    %v770 = vadd.f32 0.0, %v769
    %v771 = vpop.f32.mrb[0].mxu0
    %v772 = vpop.f32.mrb[0].mxu0
    %v773 = vadd.f32 0.0, %v772
    %v774 = vpop.f32.mrb[0].mxu0
    %775 = vmatprep.mubr.bf16.mxu0 0
    %776 = vmatmul.mubr.bf16.gmra.mrb[0].mxu0 %v447
    %v777 = vpop.f32.mrb[0].mxu0
    %v778 = vadd.f32 0.0, %v777
    %v779 = vpop.f32.mrb[0].mxu0
    %v780 = vpop.f32.mrb[0].mxu0
    %v781 = vadd.f32 0.0, %v780
    %v782 = vpop.f32.mrb[0].mxu0
    %783 = vmatprep.mubr.bf16.mxu0 0
    %784 = vmatmul.mubr.bf16.gmra.mrb[0].mxu0 %v448
    %v785 = vpop.f32.mrb[0].mxu0
    %v786 = vadd.f32 0.0, %v785
    %v787 = vpop.f32.mrb[0].mxu0
    %v788 = vpop.f32.mrb[0].mxu0
    %v789 = vadd.f32 0.0, %v788
    %v790 = vpop.f32.mrb[0].mxu0
    %791 = vmatprep.mubr.bf16.mxu0 0
    %792 = vmatmul.mubr.bf16.gmra.mrb[0].mxu0 %v449
    %v793 = vpop.f32.mrb[0].mxu0
    %v794 = vadd.f32 0.0, %v793
    %v795 = vpop.f32.mrb[0].mxu0
    %v796 = vpop.f32.mrb[0].mxu0
    %v797 = vadd.f32 0.0, %v796
    %v798 = vpop.f32.mrb[0].mxu0
    %799 = vmatprep.mubr.bf16.mxu0 0
    %800 = vmatmul.mubr.bf16.gmra.mrb[0].mxu0 %v450
    %v801 = vpop.f32.mrb[0].mxu0
    %v802 = vadd.f32 0.0, %v801
    %v803 = vpop.f32.mrb[0].mxu0
    %v804 = vpop.f32.mrb[0].mxu0
    %v805 = vadd.f32 0.0, %v804
    %v806 = vpop.f32.mrb[0].mxu0
    %807 = vmatprep.mubr.bf16.mxu0 0
    %808 = vmatmul.mubr.bf16.gmra.mrb[0].mxu0 %v451
    %v809 = vpop.f32.mrb[0].mxu0
    %v810 = vadd.f32 0.0, %v809
    %v811 = vpop.f32.mrb[0].mxu0
    %v812 = vpop.f32.mrb[0].mxu0
    %v813 = vadd.f32 0.0, %v812
    %v814 = vpop.f32.mrb[0].mxu0
    %815 = vmatprep.mubr.bf16.mxu0 0
    %816 = vmatmul.mubr.bf16.gmra.mrb[0].mxu0 %v452
    %v817 = vpop.f32.mrb[0].mxu0
    %v818 = vadd.f32 0.0, %v817
    %v819 = vpop.f32.mrb[0].mxu0
    %v820 = vpop.f32.mrb[0].mxu0
    %v821 = vadd.f32 0.0, %v820
    %v822 = vpop.f32.mrb[0].mxu0
    %823 = vmatprep.mubr.bf16.mxu0 0
    %824 = vmatmul.mubr.bf16.gmra.mrb[0].mxu0 %v453
    %v825 = vpop.f32.mrb[0].mxu0
    %v826 = vadd.f32 0.0, %v825
    %v827 = vpop.f32.mrb[0].mxu0
    %v828 = vpop.f32.mrb[0].mxu0
    %v829 = vadd.f32 0.0, %v828
    %v830 = vpop.f32.mrb[0].mxu0
    %831 = vmatprep.mubr.bf16.mxu0 0
    %832 = vmatmul.mubr.bf16.gmra.mrb[0].mxu0 %v454
    %v833 = vpop.f32.mrb[0].mxu0
    %v834 = vadd.f32 0.0, %v833
    %v835 = vpop.f32.mrb[0].mxu0
    %v836 = vpop.f32.mrb[0].mxu0
    %v837 = vadd.f32 0.0, %v836
    %v838 = vpop.f32.mrb[0].mxu0
    %839 = vmatprep.mubr.bf16.mxu0 0
    %840 = vmatmul.mubr.bf16.gmra.mrb[0].mxu0 %v455
    %v841 = vpop.f32.mrb[0].mxu0
    %v842 = vadd.f32 0.0, %v841
    %v843 = vpop.f32.mrb[0].mxu0
    %v844 = vpop.f32.mrb[0].mxu0
    %v845 = vadd.f32 0.0, %v844
    %v846 = vpop.f32.mrb[0].mxu0
    %847 = vmatprep.mubr.bf16.mxu0 0
    %848 = vmatmul.mubr.bf16.gmra.mrb[0].mxu0 %v456
    %v849 = vpop.f32.mrb[0].mxu0
    %v850 = vadd.f32 0.0, %v849
    %v851 = vpop.f32.mrb[0].mxu0
    %v852 = vpop.f32.mrb[0].mxu0
    %v853 = vadd.f32 0.0, %v852
    %v854 = vpop.f32.mrb[0].mxu0
    %855 = vmatprep.mubr.bf16.mxu0 0
    %856 = vmatmul.mubr.bf16.gmra.mrb[0].mxu0 %v457
    %v857 = vpop.f32.mrb[0].mxu0
    %v858 = vadd.f32 0.0, %v857
    %v859 = vpop.f32.mrb[0].mxu0
    %v860 = vpop.f32.mrb[0].mxu0
    %v861 = vadd.f32 0.0, %v860
    %v862 = vpop.f32.mrb[0].mxu0
    %863 = vmatprep.mubr.bf16.mxu0 0
    %864 = vmatmul.mubr.bf16.gmra.mrb[0].mxu0 %v458
    %v865 = vpop.f32.mrb[0].mxu0
    %v866 = vadd.f32 0.0, %v865
    %v867 = vpop.f32.mrb[0].mxu0
    %v868 = vpop.f32.mrb[0].mxu0
    %v869 = vadd.f32 0.0, %v868
    %v870 = vpop.f32.mrb[0].mxu0
    %871 = vmatprep.mubr.bf16.mxu0 0
    %872 = vmatmul.mubr.bf16.gmra.mrb[0].mxu0 %v459
    %v873 = vpop.f32.mrb[0].mxu0
    %v874 = vadd.f32 0.0, %v873
    %v875 = vpop.f32.mrb[0].mxu0
    %v876 = vpop.f32.mrb[0].mxu0
    %v877 = vadd.f32 0.0, %v876
    %v878 = vpop.f32.mrb[0].mxu0
    %879 = vmatprep.mubr.bf16.mxu0 0
    %880 = vmatmul.mubr.bf16.gmra.mrb[0].mxu0 %v460
    %v881 = vpop.f32.mrb[0].mxu0
    %v882 = vadd.f32 0.0, %v881
    %v883 = vpop.f32.mrb[0].mxu0
    %v884 = vpop.f32.mrb[0].mxu0
    %v885 = vadd.f32 0.0, %v884
    %v886 = vpop.f32.mrb[0].mxu0
    %887 = vmatprep.mubr.bf16.mxu0 0
    %888 = vmatmul.mubr.bf16.gmra.mrb[0].mxu0 %v461
    %v889 = vpop.f32.mrb[0].mxu0
    %v890 = vadd.f32 0.0, %v889
    %v891 = vpop.f32.mrb[0].mxu0
    %v892 = vpop.f32.mrb[0].mxu0
    %v893 = vadd.f32 0.0, %v892
    %v894 = vpop.f32.mrb[0].mxu0
    %895 = vdwg.mxu0
    %v912 = vunpack.c.l.b16 %v655
    %v913 = vunpack.c.l.b16 %v656
    %v914 = vunpack.c.l.b16 %v657
    %v915 = vunpack.c.l.b16 %v658
    %v916 = vunpack.c.l.b16 %v659
    %v917 = vunpack.c.l.b16 %v660
    %v918 = vunpack.c.l.b16 %v661
    %v919 = vunpack.c.l.b16 %v662
    %v920 = vunpack.c.l.b16 %v663
    %v921 = vunpack.c.l.b16 %v664
    %v922 = vunpack.c.l.b16 %v665
    %v923 = vunpack.c.l.b16 %v666
    %v924 = vunpack.c.l.b16 %v667
    %v925 = vunpack.c.l.b16 %v668
    %v926 = vunpack.c.l.b16 %v669
    %v927 = vunpack.c.l.b16 %v670
    %v928 = vpack.c.b16 %v913, %v912
    %v929 = vpack.c.b16 %v915, %v914
    %v930 = vpack.c.b16 %v917, %v916
    %v931 = vpack.c.b16 %v919, %v918
    %v932 = vpack.c.b16 %v921, %v920
    %v933 = vpack.c.b16 %v923, %v922
    %v934 = vpack.c.b16 %v925, %v924
    %v935 = vpack.c.b16 %v927, %v926
    %944 = vmatprep.subr.bf16.mxu0 0
    %945 = vmatpush1.bf16.msra.mxu0 %v928
    %946 = vmatprep.subr.bf16.mxu0 0
    %947 = vmatpush1.bf16.msra.mxu0 %v929
    %948 = vmatprep.subr.bf16.mxu0 0
    %949 = vmatpush1.bf16.msra.mxu0 %v930
    %950 = vmatprep.subr.bf16.mxu0 0
    %951 = vmatpush1.bf16.msra.mxu0 %v931
    %952 = vmatprep.subr.bf16.mxu0 0
    %953 = vmatpush1.bf16.msra.mxu0 %v932
    %954 = vmatprep.subr.bf16.mxu0 0
    %955 = vmatpush1.bf16.msra.mxu0 %v933
    %956 = vmatprep.subr.bf16.mxu0 0
    %957 = vmatpush1.bf16.msra.mxu0 %v934
    %958 = vmatprep.subr.bf16.mxu0 0
    %959 = vmatpush1.bf16.msra.mxu0 %v935
    %960 = vmatprep.subr.bf16.mxu0 0
    %961 = vmatpush1.bf16.msra.mxu0 0
    %962 = vmatprep.subr.bf16.mxu0 0
    %963 = vmatpush1.bf16.msra.mxu0 0
    %964 = vmatprep.subr.bf16.mxu0 0
    %965 = vmatpush1.bf16.msra.mxu0 0
    %966 = vmatprep.subr.bf16.mxu0 0
    %967 = vmatpush1.bf16.msra.mxu0 0
    %968 = vmatprep.subr.bf16.mxu0 0
    %969 = vmatpush1.bf16.msra.mxu0 0
    %970 = vmatprep.subr.bf16.mxu0 0
    %971 = vmatpush1.bf16.msra.mxu0 0
    %972 = vmatprep.subr.bf16.mxu0 0
    %973 = vmatpush1.bf16.msra.mxu0 0
    %974 = vmatprep.subr.bf16.mxu0 0
    %975 = vmatpush1.bf16.msra.mxu0 0
    %976 = vmatprep.mubr.bf16.mxu0 0
    %977 = vmatmul.mubr.bf16.gmra.mrb[0].mxu0 %v639
    %v978 = vpop.f32.mrb[0].mxu0
    %v979 = vadd.f32 %v770, %v978
    %v980 = vpop.f32.mrb[0].mxu0
    %v981 = vpop.f32.mrb[0].mxu0
    %v982 = vadd.f32 %v773, %v981
    %v983 = vpop.f32.mrb[0].mxu0
    %984 = vmatprep.mubr.bf16.mxu0 0
    %985 = vmatmul.mubr.bf16.gmra.mrb[0].mxu0 %v640
    %v986 = vpop.f32.mrb[0].mxu0
    %v987 = vadd.f32 %v778, %v986
    %v988 = vpop.f32.mrb[0].mxu0
    %v989 = vpop.f32.mrb[0].mxu0
    %v990 = vadd.f32 %v781, %v989
    %v991 = vpop.f32.mrb[0].mxu0
    %992 = vmatprep.mubr.bf16.mxu0 0
    %993 = vmatmul.mubr.bf16.gmra.mrb[0].mxu0 %v641
    %v994 = vpop.f32.mrb[0].mxu0
    %v995 = vadd.f32 %v786, %v994
    %v996 = vpop.f32.mrb[0].mxu0
    %v997 = vpop.f32.mrb[0].mxu0
    %v998 = vadd.f32 %v789, %v997
    %v999 = vpop.f32.mrb[0].mxu0
    %1000 = vmatprep.mubr.bf16.mxu0 0
    %1001 = vmatmul.mubr.bf16.gmra.mrb[0].mxu0 %v642
    %v1002 = vpop.f32.mrb[0].mxu0
    %v1003 = vadd.f32 %v794, %v1002
    %v1004 = vpop.f32.mrb[0].mxu0
    %v1005 = vpop.f32.mrb[0].mxu0
    %v1006 = vadd.f32 %v797, %v1005
    %v1007 = vpop.f32.mrb[0].mxu0
    %1008 = vmatprep.mubr.bf16.mxu0 0
    %1009 = vmatmul.mubr.bf16.gmra.mrb[0].mxu0 %v643
    %v1010 = vpop.f32.mrb[0].mxu0
    %v1011 = vadd.f32 %v802, %v1010
    %v1012 = vpop.f32.mrb[0].mxu0
    %v1013 = vpop.f32.mrb[0].mxu0
    %v1014 = vadd.f32 %v805, %v1013
    %v1015 = vpop.f32.mrb[0].mxu0
    %1016 = vmatprep.mubr.bf16.mxu0 0
    %1017 = vmatmul.mubr.bf16.gmra.mrb[0].mxu0 %v644
    %v1018 = vpop.f32.mrb[0].mxu0
    %v1019 = vadd.f32 %v810, %v1018
    %v1020 = vpop.f32.mrb[0].mxu0
    %v1021 = vpop.f32.mrb[0].mxu0
    %v1022 = vadd.f32 %v813, %v1021
    %v1023 = vpop.f32.mrb[0].mxu0
    %1024 = vmatprep.mubr.bf16.mxu0 0
    %1025 = vmatmul.mubr.bf16.gmra.mrb[0].mxu0 %v645
    %v1026 = vpop.f32.mrb[0].mxu0
    %v1027 = vadd.f32 %v818, %v1026
    %v1028 = vpop.f32.mrb[0].mxu0
    %v1029 = vpop.f32.mrb[0].mxu0
    %v1030 = vadd.f32 %v821, %v1029
    %v1031 = vpop.f32.mrb[0].mxu0
    %1032 = vmatprep.mubr.bf16.mxu0 0
    %1033 = vmatmul.mubr.bf16.gmra.mrb[0].mxu0 %v646
    %v1034 = vpop.f32.mrb[0].mxu0
    %v1035 = vadd.f32 %v826, %v1034
    %v1036 = vpop.f32.mrb[0].mxu0
    %v1037 = vpop.f32.mrb[0].mxu0
    %v1038 = vadd.f32 %v829, %v1037
    %v1039 = vpop.f32.mrb[0].mxu0
    %1040 = vmatprep.mubr.bf16.mxu0 0
    %1041 = vmatmul.mubr.bf16.gmra.mrb[0].mxu0 %v647
    %v1042 = vpop.f32.mrb[0].mxu0
    %v1043 = vadd.f32 %v834, %v1042
    %v1044 = vpop.f32.mrb[0].mxu0
    %v1045 = vpop.f32.mrb[0].mxu0
    %v1046 = vadd.f32 %v837, %v1045
    %v1047 = vpop.f32.mrb[0].mxu0
    %1048 = vmatprep.mubr.bf16.mxu0 0
    %1049 = vmatmul.mubr.bf16.gmra.mrb[0].mxu0 %v648
    %v1050 = vpop.f32.mrb[0].mxu0
    %v1051 = vadd.f32 %v842, %v1050
    %v1052 = vpop.f32.mrb[0].mxu0
    %v1053 = vpop.f32.mrb[0].mxu0
    %v1054 = vadd.f32 %v845, %v1053
    %v1055 = vpop.f32.mrb[0].mxu0
    %1056 = vmatprep.mubr.bf16.mxu0 0
    %1057 = vmatmul.mubr.bf16.gmra.mrb[0].mxu0 %v649
    %v1058 = vpop.f32.mrb[0].mxu0
    %v1059 = vadd.f32 %v850, %v1058
    %v1060 = vpop.f32.mrb[0].mxu0
    %v1061 = vpop.f32.mrb[0].mxu0
    %v1062 = vadd.f32 %v853, %v1061
    %v1063 = vpop.f32.mrb[0].mxu0
    %1064 = vmatprep.mubr.bf16.mxu0 0
    %1065 = vmatmul.mubr.bf16.gmra.mrb[0].mxu0 %v650
    %v1066 = vpop.f32.mrb[0].mxu0
    %v1067 = vadd.f32 %v858, %v1066
    %v1068 = vpop.f32.mrb[0].mxu0
    %v1069 = vpop.f32.mrb[0].mxu0
    %v1070 = vadd.f32 %v861, %v1069
    %v1071 = vpop.f32.mrb[0].mxu0
    %1072 = vmatprep.mubr.bf16.mxu0 0
    %1073 = vmatmul.mubr.bf16.gmra.mrb[0].mxu0 %v651
    %v1074 = vpop.f32.mrb[0].mxu0
    %v1075 = vadd.f32 %v866, %v1074
    %v1076 = vpop.f32.mrb[0].mxu0
    %v1077 = vpop.f32.mrb[0].mxu0
    %v1078 = vadd.f32 %v869, %v1077
    %v1079 = vpop.f32.mrb[0].mxu0
    %1080 = vmatprep.mubr.bf16.mxu0 0
    %1081 = vmatmul.mubr.bf16.gmra.mrb[0].mxu0 %v652
    %v1082 = vpop.f32.mrb[0].mxu0
    %v1083 = vadd.f32 %v874, %v1082
    %v1084 = vpop.f32.mrb[0].mxu0
    %v1085 = vpop.f32.mrb[0].mxu0
    %v1086 = vadd.f32 %v877, %v1085
    %v1087 = vpop.f32.mrb[0].mxu0
    %1088 = vmatprep.mubr.bf16.mxu0 0
    %1089 = vmatmul.mubr.bf16.gmra.mrb[0].mxu0 %v653
    %v1090 = vpop.f32.mrb[0].mxu0
    %v1091 = vadd.f32 %v882, %v1090
    %v1092 = vpop.f32.mrb[0].mxu0
    %v1093 = vpop.f32.mrb[0].mxu0
    %v1094 = vadd.f32 %v885, %v1093
    %v1095 = vpop.f32.mrb[0].mxu0
    %1096 = vmatprep.mubr.bf16.mxu0 0
    %1097 = vmatmul.mubr.bf16.gmra.mrb[0].mxu0 %v654
    %v1098 = vpop.f32.mrb[0].mxu0
    %v1099 = vadd.f32 %v890, %v1098
    %v1100 = vpop.f32.mrb[0].mxu0
    %v1101 = vpop.f32.mrb[0].mxu0
    %v1102 = vadd.f32 %v893, %v1101
    %v1103 = vpop.f32.mrb[0].mxu0
    %1104 = vdwg.mxu0
    %v1105 = vld [vmem:[%s6] sm:$0x1]
    %v1107 = vlaneseq
    %v1108 = vshrl.u32 %v1107, 7
    %v1109 = vsub.s32 0, %v1108
    %v1110 = vrot.slane %v1105, %v1109
    %v1112 = vadd.f32 %v979, %v1110
    %v1113 = vadd.f32 %v982, %v1110
    %v1114 = vadd.f32 %v987, %v1110
    %v1115 = vadd.f32 %v990, %v1110
    %v1116 = vadd.f32 %v995, %v1110
    %v1117 = vadd.f32 %v998, %v1110
    %v1118 = vadd.f32 %v1003, %v1110
    %v1119 = vadd.f32 %v1006, %v1110
    %v1120 = vadd.f32 %v1011, %v1110
    %v1121 = vadd.f32 %v1014, %v1110
    %v1122 = vadd.f32 %v1019, %v1110
    %v1123 = vadd.f32 %v1022, %v1110
    %v1124 = vadd.f32 %v1027, %v1110
    %v1125 = vadd.f32 %v1030, %v1110
    %v1126 = vadd.f32 %v1035, %v1110
    %v1127 = vadd.f32 %v1038, %v1110
    %v1128 = vadd.f32 %v1043, %v1110
    %v1129 = vadd.f32 %v1046, %v1110
    %v1130 = vadd.f32 %v1051, %v1110
    %v1131 = vadd.f32 %v1054, %v1110
    %v1132 = vadd.f32 %v1059, %v1110
    %v1133 = vadd.f32 %v1062, %v1110
    %v1134 = vadd.f32 %v1067, %v1110
    %v1135 = vadd.f32 %v1070, %v1110
    %v1136 = vadd.f32 %v1075, %v1110
    %v1137 = vadd.f32 %v1078, %v1110
    %v1138 = vadd.f32 %v1083, %v1110
    %v1139 = vadd.f32 %v1086, %v1110
    %v1140 = vadd.f32 %v1091, %v1110
    %v1141 = vadd.f32 %v1094, %v1110
    %v1142 = vadd.f32 %v1099, %v1110
    %v1143 = vadd.f32 %v1102, %v1110
    %v1144 = vmax.f32 %v1112, 0.0
    %v1145 = vmax.f32 %v1113, 0.0
    %v1146 = vmax.f32 %v1114, 0.0
    %v1147 = vmax.f32 %v1115, 0.0
    %v1148 = vmax.f32 %v1116, 0.0
    %v1149 = vmax.f32 %v1117, 0.0
    %v1150 = vmax.f32 %v1118, 0.0
    %v1151 = vmax.f32 %v1119, 0.0
    %v1152 = vmax.f32 %v1120, 0.0
    %v1153 = vmax.f32 %v1121, 0.0
    %v1154 = vmax.f32 %v1122, 0.0
    %v1155 = vmax.f32 %v1123, 0.0
    %v1156 = vmax.f32 %v1124, 0.0
    %v1157 = vmax.f32 %v1125, 0.0
    %v1158 = vmax.f32 %v1126, 0.0
    %v1159 = vmax.f32 %v1127, 0.0
    %v1160 = vmax.f32 %v1128, 0.0
    %v1161 = vmax.f32 %v1129, 0.0
    %v1162 = vmax.f32 %v1130, 0.0
    %v1163 = vmax.f32 %v1131, 0.0
    %v1164 = vmax.f32 %v1132, 0.0
    %v1165 = vmax.f32 %v1133, 0.0
    %v1166 = vmax.f32 %v1134, 0.0
    %v1167 = vmax.f32 %v1135, 0.0
    %v1168 = vmax.f32 %v1136, 0.0
    %v1169 = vmax.f32 %v1137, 0.0
    %v1170 = vmax.f32 %v1138, 0.0
    %v1171 = vmax.f32 %v1139, 0.0
    %v1172 = vmax.f32 %v1140, 0.0
    %v1173 = vmax.f32 %v1141, 0.0
    %v1174 = vmax.f32 %v1142, 0.0
    %v1175 = vmax.f32 %v1143, 0.0
    %v1176 = vpack.c.bf16 %v1145, %v1144
    %v1177 = vpack.c.bf16 %v1147, %v1146
    %v1178 = vpack.c.bf16 %v1149, %v1148
    %v1179 = vpack.c.bf16 %v1151, %v1150
    %v1180 = vpack.c.bf16 %v1153, %v1152
    %v1181 = vpack.c.bf16 %v1155, %v1154
    %v1182 = vpack.c.bf16 %v1157, %v1156
    %v1183 = vpack.c.bf16 %v1159, %v1158
    %v1184 = vpack.c.bf16 %v1161, %v1160
    %v1185 = vpack.c.bf16 %v1163, %v1162
    %v1186 = vpack.c.bf16 %v1165, %v1164
    %v1187 = vpack.c.bf16 %v1167, %v1166
    %v1188 = vpack.c.bf16 %v1169, %v1168
    %v1189 = vpack.c.bf16 %v1171, %v1170
    %v1190 = vpack.c.bf16 %v1173, %v1172
    %v1191 = vpack.c.bf16 %v1175, %v1174
    %1192 = vmatprep.subr.bf16.mxu0 0
    %1193 = vmatpush1.bf16.msra.mxu0 %v1176
    %1194 = vmatprep.subr.bf16.mxu0 0
    %1195 = vmatpush1.bf16.msra.mxu0 %v1177
    %1196 = vmatprep.subr.bf16.mxu0 0
    %1197 = vmatpush1.bf16.msra.mxu0 %v1178
    %1198 = vmatprep.subr.bf16.mxu0 0
    %1199 = vmatpush1.bf16.msra.mxu0 %v1179
    %1200 = vmatprep.subr.bf16.mxu0 0
    %1201 = vmatpush1.bf16.msra.mxu0 %v1180
    %1202 = vmatprep.subr.bf16.mxu0 0
    %1203 = vmatpush1.bf16.msra.mxu0 %v1181
    %1204 = vmatprep.subr.bf16.mxu0 0
    %1205 = vmatpush1.bf16.msra.mxu0 %v1182
    %1206 = vmatprep.subr.bf16.mxu0 0
    %1207 = vmatpush1.bf16.msra.mxu0 %v1183
    %1208 = vmatprep.subr.bf16.mxu0 0
    %1209 = vmatpush1.bf16.msra.mxu0 %v1184
    %1210 = vmatprep.subr.bf16.mxu0 0
    %1211 = vmatpush1.bf16.msra.mxu0 %v1185
    %1212 = vmatprep.subr.bf16.mxu0 0
    %1213 = vmatpush1.bf16.msra.mxu0 %v1186
    %1214 = vmatprep.subr.bf16.mxu0 0
    %1215 = vmatpush1.bf16.msra.mxu0 %v1187
    %1216 = vmatprep.subr.bf16.mxu0 0
    %1217 = vmatpush1.bf16.msra.mxu0 %v1188
    %1218 = vmatprep.subr.bf16.mxu0 0
    %1219 = vmatpush1.bf16.msra.mxu0 %v1189
    %1220 = vmatprep.subr.bf16.mxu0 0
    %1221 = vmatpush1.bf16.msra.mxu0 %v1190
    %1222 = vmatprep.subr.bf16.mxu0 0
    %1223 = vmatpush1.bf16.msra.mxu0 %v1191
    %1224 = vmatprep.mubr.bf16.mxu0 %v319
    %1225 = vmatmul.mubr.bf16.gmra.mrb[0].mxu0 %v318
    %v1226 = vpop.f32.mrb[0].mxu0
    %v1227 = vadd.f32 0.0, %v1226
    %v1228 = vpop.f32.mrb[0].mxu0
    %v1229 = vpop.f32.mrb[0].mxu0
    %v1230 = vadd.f32 0.0, %v1229
    %v1231 = vpop.f32.mrb[0].mxu0
    %1232 = vmatprep.mubr.bf16.mxu0 %v321
    %1233 = vmatmul.mubr.bf16.gmra.mrb[0].mxu0 %v320
    %v1234 = vpop.f32.mrb[0].mxu0
    %v1235 = vadd.f32 0.0, %v1234
    %v1236 = vpop.f32.mrb[0].mxu0
    %v1237 = vpop.f32.mrb[0].mxu0
    %v1238 = vadd.f32 0.0, %v1237
    %v1239 = vpop.f32.mrb[0].mxu0
    %1240 = vmatprep.mubr.bf16.mxu0 %v323
    %1241 = vmatmul.mubr.bf16.gmra.mrb[0].mxu0 %v322
    %v1242 = vpop.f32.mrb[0].mxu0
    %v1243 = vadd.f32 0.0, %v1242
    %v1244 = vpop.f32.mrb[0].mxu0
    %v1245 = vpop.f32.mrb[0].mxu0
    %v1246 = vadd.f32 0.0, %v1245
    %v1247 = vpop.f32.mrb[0].mxu0
    %1248 = vmatprep.mubr.bf16.mxu0 %v325
    %1249 = vmatmul.mubr.bf16.gmra.mrb[0].mxu0 %v324
    %v1250 = vpop.f32.mrb[0].mxu0
    %v1251 = vadd.f32 0.0, %v1250
    %v1252 = vpop.f32.mrb[0].mxu0
    %v1253 = vpop.f32.mrb[0].mxu0
    %v1254 = vadd.f32 0.0, %v1253
    %v1255 = vpop.f32.mrb[0].mxu0
    %1256 = vmatprep.mubr.bf16.mxu0 %v327
    %1257 = vmatmul.mubr.bf16.gmra.mrb[0].mxu0 %v326
    %v1258 = vpop.f32.mrb[0].mxu0
    %v1259 = vadd.f32 0.0, %v1258
    %v1260 = vpop.f32.mrb[0].mxu0
    %v1261 = vpop.f32.mrb[0].mxu0
    %v1262 = vadd.f32 0.0, %v1261
    %v1263 = vpop.f32.mrb[0].mxu0
    %1264 = vmatprep.mubr.bf16.mxu0 %v329
    %1265 = vmatmul.mubr.bf16.gmra.mrb[0].mxu0 %v328
    %v1266 = vpop.f32.mrb[0].mxu0
    %v1267 = vadd.f32 0.0, %v1266
    %v1268 = vpop.f32.mrb[0].mxu0
    %v1269 = vpop.f32.mrb[0].mxu0
    %v1270 = vadd.f32 0.0, %v1269
    %v1271 = vpop.f32.mrb[0].mxu0
    %1272 = vmatprep.mubr.bf16.mxu0 %v331
    %1273 = vmatmul.mubr.bf16.gmra.mrb[0].mxu0 %v330
    %v1274 = vpop.f32.mrb[0].mxu0
    %v1275 = vadd.f32 0.0, %v1274
    %v1276 = vpop.f32.mrb[0].mxu0
    %v1277 = vpop.f32.mrb[0].mxu0
    %v1278 = vadd.f32 0.0, %v1277
    %v1279 = vpop.f32.mrb[0].mxu0
    %1280 = vmatprep.mubr.bf16.mxu0 %v333
    %1281 = vmatmul.mubr.bf16.gmra.mrb[0].mxu0 %v332
    %v1282 = vpop.f32.mrb[0].mxu0
    %v1283 = vadd.f32 0.0, %v1282
    %v1284 = vpop.f32.mrb[0].mxu0
    %v1285 = vpop.f32.mrb[0].mxu0
    %v1286 = vadd.f32 0.0, %v1285
    %v1287 = vpop.f32.mrb[0].mxu0
    %1288 = vmatprep.mubr.bf16.mxu0 %v335
    %1289 = vmatmul.mubr.bf16.gmra.mrb[0].mxu0 %v334
    %v1290 = vpop.f32.mrb[0].mxu0
    %v1291 = vadd.f32 0.0, %v1290
    %v1292 = vpop.f32.mrb[0].mxu0
    %v1293 = vpop.f32.mrb[0].mxu0
    %v1294 = vadd.f32 0.0, %v1293
    %v1295 = vpop.f32.mrb[0].mxu0
    %1296 = vmatprep.mubr.bf16.mxu0 %v337
    %1297 = vmatmul.mubr.bf16.gmra.mrb[0].mxu0 %v336
    %v1298 = vpop.f32.mrb[0].mxu0
    %v1299 = vadd.f32 0.0, %v1298
    %v1300 = vpop.f32.mrb[0].mxu0
    %v1301 = vpop.f32.mrb[0].mxu0
    %v1302 = vadd.f32 0.0, %v1301
    %v1303 = vpop.f32.mrb[0].mxu0
    %1304 = vmatprep.mubr.bf16.mxu0 %v339
    %1305 = vmatmul.mubr.bf16.gmra.mrb[0].mxu0 %v338
    %v1306 = vpop.f32.mrb[0].mxu0
    %v1307 = vadd.f32 0.0, %v1306
    %v1308 = vpop.f32.mrb[0].mxu0
    %v1309 = vpop.f32.mrb[0].mxu0
    %v1310 = vadd.f32 0.0, %v1309
    %v1311 = vpop.f32.mrb[0].mxu0
    %1312 = vmatprep.mubr.bf16.mxu0 %v341
    %1313 = vmatmul.mubr.bf16.gmra.mrb[0].mxu0 %v340
    %v1314 = vpop.f32.mrb[0].mxu0
    %v1315 = vadd.f32 0.0, %v1314
    %v1316 = vpop.f32.mrb[0].mxu0
    %v1317 = vpop.f32.mrb[0].mxu0
    %v1318 = vadd.f32 0.0, %v1317
    %v1319 = vpop.f32.mrb[0].mxu0
    %1320 = vmatprep.mubr.bf16.mxu0 %v343
    %1321 = vmatmul.mubr.bf16.gmra.mrb[0].mxu0 %v342
    %v1322 = vpop.f32.mrb[0].mxu0
    %v1323 = vadd.f32 0.0, %v1322
    %v1324 = vpop.f32.mrb[0].mxu0
    %v1325 = vpop.f32.mrb[0].mxu0
    %v1326 = vadd.f32 0.0, %v1325
    %v1327 = vpop.f32.mrb[0].mxu0
    %1328 = vmatprep.mubr.bf16.mxu0 %v345
    %1329 = vmatmul.mubr.bf16.gmra.mrb[0].mxu0 %v344
    %v1330 = vpop.f32.mrb[0].mxu0
    %v1331 = vadd.f32 0.0, %v1330
    %v1332 = vpop.f32.mrb[0].mxu0
    %v1333 = vpop.f32.mrb[0].mxu0
    %v1334 = vadd.f32 0.0, %v1333
    %v1335 = vpop.f32.mrb[0].mxu0
    %1336 = vmatprep.mubr.bf16.mxu0 %v347
    %1337 = vmatmul.mubr.bf16.gmra.mrb[0].mxu0 %v346
    %v1338 = vpop.f32.mrb[0].mxu0
    %v1339 = vadd.f32 0.0, %v1338
    %v1340 = vpop.f32.mrb[0].mxu0
    %v1341 = vpop.f32.mrb[0].mxu0
    %v1342 = vadd.f32 0.0, %v1341
    %v1343 = vpop.f32.mrb[0].mxu0
    %1344 = vmatprep.mubr.bf16.mxu0 %v349
    %1345 = vmatmul.mubr.bf16.gmra.mrb[0].mxu0 %v348
    %v1346 = vpop.f32.mrb[0].mxu0
    %v1347 = vadd.f32 0.0, %v1346
    %v1348 = vpop.f32.mrb[0].mxu0
    %v1349 = vpop.f32.mrb[0].mxu0
    %v1350 = vadd.f32 0.0, %v1349
    %v1351 = vpop.f32.mrb[0].mxu0
    %1352 = vdwg.mxu0
    %v1353 = vpack.c.bf16 %v1230, %v1227
    %v1354 = vpack.c.bf16 %v1238, %v1235
    %v1355 = vpack.c.bf16 %v1246, %v1243
    %v1356 = vpack.c.bf16 %v1254, %v1251
    %v1357 = vpack.c.bf16 %v1262, %v1259
    %v1358 = vpack.c.bf16 %v1270, %v1267
    %v1359 = vpack.c.bf16 %v1278, %v1275
    %v1360 = vpack.c.bf16 %v1286, %v1283
    %v1361 = vpack.c.bf16 %v1294, %v1291
    %v1362 = vpack.c.bf16 %v1302, %v1299
    %v1363 = vpack.c.bf16 %v1310, %v1307
    %v1364 = vpack.c.bf16 %v1318, %v1315
    %v1365 = vpack.c.bf16 %v1326, %v1323
    %v1366 = vpack.c.bf16 %v1334, %v1331
    %v1367 = vpack.c.bf16 %v1342, %v1339
    %v1368 = vpack.c.bf16 %v1350, %v1347
    %v1369 = vld [vmem:[#allocation10] sm:$0xf]
    %v1370 = vld [vmem:[#allocation10 + $0x4] sm:$0xf]
    %v1371 = vld [vmem:[#allocation10 + $0x8] sm:$0xf]
    %v1372 = vld [vmem:[#allocation10 + $0xc] sm:$0xf]
    %v1373 = vld [vmem:[#allocation10 + $0x10] sm:$0xf]
    %v1374 = vld [vmem:[#allocation10 + $0x14] sm:$0xf]
    %v1375 = vld [vmem:[#allocation10 + $0x18] sm:$0xf]
    %v1376 = vld [vmem:[#allocation10 + $0x1c] sm:$0xf]
    %v1377 = vld [vmem:[#allocation10 + $0x20] sm:$0xf]
    %v1378 = vld [vmem:[#allocation10 + $0x24] sm:$0xf]
    %v1379 = vld [vmem:[#allocation10 + $0x28] sm:$0xf]
    %v1380 = vld [vmem:[#allocation10 + $0x2c] sm:$0xf]
    %v1381 = vld [vmem:[#allocation10 + $0x30] sm:$0xf]
    %v1382 = vld [vmem:[#allocation10 + $0x34] sm:$0xf]
    %v1383 = vld [vmem:[#allocation10 + $0x38] sm:$0xf]
    %v1384 = vld [vmem:[#allocation10 + $0x3c] sm:$0xf]
    %v1385 = vld [vmem:[#allocation11] sm:$0xf]
    %v1386 = vld [vmem:[#allocation11 + $0x4] sm:$0xf]
    %v1387 = vld [vmem:[#allocation11 + $0x8] sm:$0xf]
    %v1388 = vld [vmem:[#allocation11 + $0xc] sm:$0xf]
    %v1389 = vld [vmem:[#allocation11 + $0x10] sm:$0xf]
    %v1390 = vld [vmem:[#allocation11 + $0x14] sm:$0xf]
    %v1391 = vld [vmem:[#allocation11 + $0x18] sm:$0xf]
    %v1392 = vld [vmem:[#allocation11 + $0x1c] sm:$0xf]
    %v1393 = vld [vmem:[#allocation11 + $0x20] sm:$0xf]
    %v1394 = vld [vmem:[#allocation11 + $0x24] sm:$0xf]
    %v1395 = vld [vmem:[#allocation11 + $0x28] sm:$0xf]
    %v1396 = vld [vmem:[#allocation11 + $0x2c] sm:$0xf]
    %v1397 = vld [vmem:[#allocation11 + $0x30] sm:$0xf]
    %v1398 = vld [vmem:[#allocation11 + $0x34] sm:$0xf]
    %v1399 = vld [vmem:[#allocation11 + $0x38] sm:$0xf]
    %v1400 = vld [vmem:[#allocation11 + $0x3c] sm:$0xf]
    %v1417 = vunpack.c.l.b16 %v1385
    %v1418 = vunpack.c.l.b16 %v1386
    %v1419 = vunpack.c.l.b16 %v1387
    %v1420 = vunpack.c.l.b16 %v1388
    %v1421 = vunpack.c.l.b16 %v1389
    %v1422 = vunpack.c.l.b16 %v1390
    %v1423 = vunpack.c.l.b16 %v1391
    %v1424 = vunpack.c.l.b16 %v1392
    %v1425 = vunpack.c.l.b16 %v1393
    %v1426 = vunpack.c.l.b16 %v1394
    %v1427 = vunpack.c.l.b16 %v1395
    %v1428 = vunpack.c.l.b16 %v1396
    %v1429 = vunpack.c.l.b16 %v1397
    %v1430 = vunpack.c.l.b16 %v1398
    %v1431 = vunpack.c.l.b16 %v1399
    %v1432 = vunpack.c.l.b16 %v1400
    %v1433 = vpack.c.b16 %v1418, %v1417
    %v1434 = vpack.c.b16 %v1420, %v1419
    %v1435 = vpack.c.b16 %v1422, %v1421
    %v1436 = vpack.c.b16 %v1424, %v1423
    %v1437 = vpack.c.b16 %v1426, %v1425
    %v1438 = vpack.c.b16 %v1428, %v1427
    %v1439 = vpack.c.b16 %v1430, %v1429
    %v1440 = vpack.c.b16 %v1432, %v1431
    %1449 = vmatprep.subr.bf16.mxu0 0
    %1450 = vmatpush1.bf16.msra.mxu0 %v1433
    %1451 = vmatprep.subr.bf16.mxu0 0
    %1452 = vmatpush1.bf16.msra.mxu0 %v1434
    %1453 = vmatprep.subr.bf16.mxu0 0
    %1454 = vmatpush1.bf16.msra.mxu0 %v1435
    %1455 = vmatprep.subr.bf16.mxu0 0
    %1456 = vmatpush1.bf16.msra.mxu0 %v1436
    %1457 = vmatprep.subr.bf16.mxu0 0
    %1458 = vmatpush1.bf16.msra.mxu0 %v1437
    %1459 = vmatprep.subr.bf16.mxu0 0
    %1460 = vmatpush1.bf16.msra.mxu0 %v1438
    %1461 = vmatprep.subr.bf16.mxu0 0
    %1462 = vmatpush1.bf16.msra.mxu0 %v1439
    %1463 = vmatprep.subr.bf16.mxu0 0
    %1464 = vmatpush1.bf16.msra.mxu0 %v1440
    %1465 = vmatprep.subr.bf16.mxu0 0
    %1466 = vmatpush1.bf16.msra.mxu0 0
    %1467 = vmatprep.subr.bf16.mxu0 0
    %1468 = vmatpush1.bf16.msra.mxu0 0
    %1469 = vmatprep.subr.bf16.mxu0 0
    %1470 = vmatpush1.bf16.msra.mxu0 0
    %1471 = vmatprep.subr.bf16.mxu0 0
    %1472 = vmatpush1.bf16.msra.mxu0 0
    %1473 = vmatprep.subr.bf16.mxu0 0
    %1474 = vmatpush1.bf16.msra.mxu0 0
    %1475 = vmatprep.subr.bf16.mxu0 0
    %1476 = vmatpush1.bf16.msra.mxu0 0
    %1477 = vmatprep.subr.bf16.mxu0 0
    %1478 = vmatpush1.bf16.msra.mxu0 0
    %1479 = vmatprep.subr.bf16.mxu0 0
    %1480 = vmatpush1.bf16.msra.mxu0 0
    %1481 = vmatprep.mubr.bf16.mxu0 0
    %1482 = vmatmul.mubr.bf16.gmra.mrb[0].mxu0 %v1176
    %v1483 = vpop.f32.mrb[0].mxu0
    %v1484 = vadd.f32 0.0, %v1483
    %v1485 = vpop.f32.mrb[0].mxu0
    %v1486 = vpop.f32.mrb[0].mxu0
    %v1487 = vadd.f32 0.0, %v1486
    %v1488 = vpop.f32.mrb[0].mxu0
    %1489 = vmatprep.mubr.bf16.mxu0 0
    %1490 = vmatmul.mubr.bf16.gmra.mrb[0].mxu0 %v1177
    %v1491 = vpop.f32.mrb[0].mxu0
    %v1492 = vadd.f32 0.0, %v1491
    %v1493 = vpop.f32.mrb[0].mxu0
    %v1494 = vpop.f32.mrb[0].mxu0
    %v1495 = vadd.f32 0.0, %v1494
    %v1496 = vpop.f32.mrb[0].mxu0
    %1497 = vmatprep.mubr.bf16.mxu0 0
    %1498 = vmatmul.mubr.bf16.gmra.mrb[0].mxu0 %v1178
    %v1499 = vpop.f32.mrb[0].mxu0
    %v1500 = vadd.f32 0.0, %v1499
    %v1501 = vpop.f32.mrb[0].mxu0
    %v1502 = vpop.f32.mrb[0].mxu0
    %v1503 = vadd.f32 0.0, %v1502
    %v1504 = vpop.f32.mrb[0].mxu0
    %1505 = vmatprep.mubr.bf16.mxu0 0
    %1506 = vmatmul.mubr.bf16.gmra.mrb[0].mxu0 %v1179
    %v1507 = vpop.f32.mrb[0].mxu0
    %v1508 = vadd.f32 0.0, %v1507
    %v1509 = vpop.f32.mrb[0].mxu0
    %v1510 = vpop.f32.mrb[0].mxu0
    %v1511 = vadd.f32 0.0, %v1510
    %v1512 = vpop.f32.mrb[0].mxu0
    %1513 = vmatprep.mubr.bf16.mxu0 0
    %1514 = vmatmul.mubr.bf16.gmra.mrb[0].mxu0 %v1180
    %v1515 = vpop.f32.mrb[0].mxu0
    %v1516 = vadd.f32 0.0, %v1515
    %v1517 = vpop.f32.mrb[0].mxu0
    %v1518 = vpop.f32.mrb[0].mxu0
    %v1519 = vadd.f32 0.0, %v1518
    %v1520 = vpop.f32.mrb[0].mxu0
    %1521 = vmatprep.mubr.bf16.mxu0 0
    %1522 = vmatmul.mubr.bf16.gmra.mrb[0].mxu0 %v1181
    %v1523 = vpop.f32.mrb[0].mxu0
    %v1524 = vadd.f32 0.0, %v1523
    %v1525 = vpop.f32.mrb[0].mxu0
    %v1526 = vpop.f32.mrb[0].mxu0
    %v1527 = vadd.f32 0.0, %v1526
    %v1528 = vpop.f32.mrb[0].mxu0
    %1529 = vmatprep.mubr.bf16.mxu0 0
    %1530 = vmatmul.mubr.bf16.gmra.mrb[0].mxu0 %v1182
    %v1531 = vpop.f32.mrb[0].mxu0
    %v1532 = vadd.f32 0.0, %v1531
    %v1533 = vpop.f32.mrb[0].mxu0
    %v1534 = vpop.f32.mrb[0].mxu0
    %v1535 = vadd.f32 0.0, %v1534
    %v1536 = vpop.f32.mrb[0].mxu0
    %1537 = vmatprep.mubr.bf16.mxu0 0
    %1538 = vmatmul.mubr.bf16.gmra.mrb[0].mxu0 %v1183
    %v1539 = vpop.f32.mrb[0].mxu0
    %v1540 = vadd.f32 0.0, %v1539
    %v1541 = vpop.f32.mrb[0].mxu0
    %v1542 = vpop.f32.mrb[0].mxu0
    %v1543 = vadd.f32 0.0, %v1542
    %v1544 = vpop.f32.mrb[0].mxu0
    %1545 = vmatprep.mubr.bf16.mxu0 0
    %1546 = vmatmul.mubr.bf16.gmra.mrb[0].mxu0 %v1184
    %v1547 = vpop.f32.mrb[0].mxu0
    %v1548 = vadd.f32 0.0, %v1547
    %v1549 = vpop.f32.mrb[0].mxu0
    %v1550 = vpop.f32.mrb[0].mxu0
    %v1551 = vadd.f32 0.0, %v1550
    %v1552 = vpop.f32.mrb[0].mxu0
    %1553 = vmatprep.mubr.bf16.mxu0 0
    %1554 = vmatmul.mubr.bf16.gmra.mrb[0].mxu0 %v1185
    %v1555 = vpop.f32.mrb[0].mxu0
    %v1556 = vadd.f32 0.0, %v1555
    %v1557 = vpop.f32.mrb[0].mxu0
    %v1558 = vpop.f32.mrb[0].mxu0
    %v1559 = vadd.f32 0.0, %v1558
    %v1560 = vpop.f32.mrb[0].mxu0
    %1561 = vmatprep.mubr.bf16.mxu0 0
    %1562 = vmatmul.mubr.bf16.gmra.mrb[0].mxu0 %v1186
    %v1563 = vpop.f32.mrb[0].mxu0
    %v1564 = vadd.f32 0.0, %v1563
    %v1565 = vpop.f32.mrb[0].mxu0
    %v1566 = vpop.f32.mrb[0].mxu0
    %v1567 = vadd.f32 0.0, %v1566
    %v1568 = vpop.f32.mrb[0].mxu0
    %1569 = vmatprep.mubr.bf16.mxu0 0
    %1570 = vmatmul.mubr.bf16.gmra.mrb[0].mxu0 %v1187
    %v1571 = vpop.f32.mrb[0].mxu0
    %v1572 = vadd.f32 0.0, %v1571
    %v1573 = vpop.f32.mrb[0].mxu0
    %v1574 = vpop.f32.mrb[0].mxu0
    %v1575 = vadd.f32 0.0, %v1574
    %v1576 = vpop.f32.mrb[0].mxu0
    %1577 = vmatprep.mubr.bf16.mxu0 0
    %1578 = vmatmul.mubr.bf16.gmra.mrb[0].mxu0 %v1188
    %v1579 = vpop.f32.mrb[0].mxu0
    %v1580 = vadd.f32 0.0, %v1579
    %v1581 = vpop.f32.mrb[0].mxu0
    %v1582 = vpop.f32.mrb[0].mxu0
    %v1583 = vadd.f32 0.0, %v1582
    %v1584 = vpop.f32.mrb[0].mxu0
    %1585 = vmatprep.mubr.bf16.mxu0 0
    %1586 = vmatmul.mubr.bf16.gmra.mrb[0].mxu0 %v1189
    %v1587 = vpop.f32.mrb[0].mxu0
    %v1588 = vadd.f32 0.0, %v1587
    %v1589 = vpop.f32.mrb[0].mxu0
    %v1590 = vpop.f32.mrb[0].mxu0
    %v1591 = vadd.f32 0.0, %v1590
    %v1592 = vpop.f32.mrb[0].mxu0
    %1593 = vmatprep.mubr.bf16.mxu0 0
    %1594 = vmatmul.mubr.bf16.gmra.mrb[0].mxu0 %v1190
    %v1595 = vpop.f32.mrb[0].mxu0
    %v1596 = vadd.f32 0.0, %v1595
    %v1597 = vpop.f32.mrb[0].mxu0
    %v1598 = vpop.f32.mrb[0].mxu0
    %v1599 = vadd.f32 0.0, %v1598
    %v1600 = vpop.f32.mrb[0].mxu0
    %1601 = vmatprep.mubr.bf16.mxu0 0
    %1602 = vmatmul.mubr.bf16.gmra.mrb[0].mxu0 %v1191
    %v1603 = vpop.f32.mrb[0].mxu0
    %v1604 = vadd.f32 0.0, %v1603
    %v1605 = vpop.f32.mrb[0].mxu0
    %v1606 = vpop.f32.mrb[0].mxu0
    %v1607 = vadd.f32 0.0, %v1606
    %v1608 = vpop.f32.mrb[0].mxu0
    %1609 = vdwg.mxu0
    %v1626 = vunpack.c.l.b16 %v1369
    %v1627 = vunpack.c.l.b16 %v1370
    %v1628 = vunpack.c.l.b16 %v1371
    %v1629 = vunpack.c.l.b16 %v1372
    %v1630 = vunpack.c.l.b16 %v1373
    %v1631 = vunpack.c.l.b16 %v1374
    %v1632 = vunpack.c.l.b16 %v1375
    %v1633 = vunpack.c.l.b16 %v1376
    %v1634 = vunpack.c.l.b16 %v1377
    %v1635 = vunpack.c.l.b16 %v1378
    %v1636 = vunpack.c.l.b16 %v1379
    %v1637 = vunpack.c.l.b16 %v1380
    %v1638 = vunpack.c.l.b16 %v1381
    %v1639 = vunpack.c.l.b16 %v1382
    %v1640 = vunpack.c.l.b16 %v1383
    %v1641 = vunpack.c.l.b16 %v1384
    %v1642 = vpack.c.b16 %v1627, %v1626
    %v1643 = vpack.c.b16 %v1629, %v1628
    %v1644 = vpack.c.b16 %v1631, %v1630
    %v1645 = vpack.c.b16 %v1633, %v1632
    %v1646 = vpack.c.b16 %v1635, %v1634
    %v1647 = vpack.c.b16 %v1637, %v1636
    %v1648 = vpack.c.b16 %v1639, %v1638
    %v1649 = vpack.c.b16 %v1641, %v1640
    %1658 = vmatprep.subr.bf16.mxu0 0
    %1659 = vmatpush1.bf16.msra.mxu0 %v1642
    %1660 = vmatprep.subr.bf16.mxu0 0
    %1661 = vmatpush1.bf16.msra.mxu0 %v1643
    %1662 = vmatprep.subr.bf16.mxu0 0
    %1663 = vmatpush1.bf16.msra.mxu0 %v1644
    %1664 = vmatprep.subr.bf16.mxu0 0
    %1665 = vmatpush1.bf16.msra.mxu0 %v1645
    %1666 = vmatprep.subr.bf16.mxu0 0
    %1667 = vmatpush1.bf16.msra.mxu0 %v1646
    %1668 = vmatprep.subr.bf16.mxu0 0
    %1669 = vmatpush1.bf16.msra.mxu0 %v1647
    %1670 = vmatprep.subr.bf16.mxu0 0
    %1671 = vmatpush1.bf16.msra.mxu0 %v1648
    %1672 = vmatprep.subr.bf16.mxu0 0
    %1673 = vmatpush1.bf16.msra.mxu0 %v1649
    %1674 = vmatprep.subr.bf16.mxu0 0
    %1675 = vmatpush1.bf16.msra.mxu0 0
    %1676 = vmatprep.subr.bf16.mxu0 0
    %1677 = vmatpush1.bf16.msra.mxu0 0
    %1678 = vmatprep.subr.bf16.mxu0 0
    %1679 = vmatpush1.bf16.msra.mxu0 0
    %1680 = vmatprep.subr.bf16.mxu0 0
    %1681 = vmatpush1.bf16.msra.mxu0 0
    %1682 = vmatprep.subr.bf16.mxu0 0
    %1683 = vmatpush1.bf16.msra.mxu0 0
    %1684 = vmatprep.subr.bf16.mxu0 0
    %1685 = vmatpush1.bf16.msra.mxu0 0
    %1686 = vmatprep.subr.bf16.mxu0 0
    %1687 = vmatpush1.bf16.msra.mxu0 0
    %1688 = vmatprep.subr.bf16.mxu0 0
    %1689 = vmatpush1.bf16.msra.mxu0 0
    %1690 = vmatprep.mubr.bf16.mxu0 0
    %1691 = vmatmul.mubr.bf16.gmra.mrb[0].mxu0 %v1353
    %v1692 = vpop.f32.mrb[0].mxu0
    %v1693 = vadd.f32 %v1484, %v1692
    %v1694 = vpop.f32.mrb[0].mxu0
    %v1695 = vpop.f32.mrb[0].mxu0
    %v1696 = vadd.f32 %v1487, %v1695
    %v1697 = vpop.f32.mrb[0].mxu0
    %1698 = vmatprep.mubr.bf16.mxu0 0
    %1699 = vmatmul.mubr.bf16.gmra.mrb[0].mxu0 %v1354
    %v1700 = vpop.f32.mrb[0].mxu0
    %v1701 = vadd.f32 %v1492, %v1700
    %v1702 = vpop.f32.mrb[0].mxu0
    %v1703 = vpop.f32.mrb[0].mxu0
    %v1704 = vadd.f32 %v1495, %v1703
    %v1705 = vpop.f32.mrb[0].mxu0
    %1706 = vmatprep.mubr.bf16.mxu0 0
    %1707 = vmatmul.mubr.bf16.gmra.mrb[0].mxu0 %v1355
    %v1708 = vpop.f32.mrb[0].mxu0
    %v1709 = vadd.f32 %v1500, %v1708
    %v1710 = vpop.f32.mrb[0].mxu0
    %v1711 = vpop.f32.mrb[0].mxu0
    %v1712 = vadd.f32 %v1503, %v1711
    %v1713 = vpop.f32.mrb[0].mxu0
    %1714 = vmatprep.mubr.bf16.mxu0 0
    %1715 = vmatmul.mubr.bf16.gmra.mrb[0].mxu0 %v1356
    %v1716 = vpop.f32.mrb[0].mxu0
    %v1717 = vadd.f32 %v1508, %v1716
    %v1718 = vpop.f32.mrb[0].mxu0
    %v1719 = vpop.f32.mrb[0].mxu0
    %v1720 = vadd.f32 %v1511, %v1719
    %v1721 = vpop.f32.mrb[0].mxu0
    %1722 = vmatprep.mubr.bf16.mxu0 0
    %1723 = vmatmul.mubr.bf16.gmra.mrb[0].mxu0 %v1357
    %v1724 = vpop.f32.mrb[0].mxu0
    %v1725 = vadd.f32 %v1516, %v1724
    %v1726 = vpop.f32.mrb[0].mxu0
    %v1727 = vpop.f32.mrb[0].mxu0
    %v1728 = vadd.f32 %v1519, %v1727
    %v1729 = vpop.f32.mrb[0].mxu0
    %1730 = vmatprep.mubr.bf16.mxu0 0
    %1731 = vmatmul.mubr.bf16.gmra.mrb[0].mxu0 %v1358
    %v1732 = vpop.f32.mrb[0].mxu0
    %v1733 = vadd.f32 %v1524, %v1732
    %v1734 = vpop.f32.mrb[0].mxu0
    %v1735 = vpop.f32.mrb[0].mxu0
    %v1736 = vadd.f32 %v1527, %v1735
    %v1737 = vpop.f32.mrb[0].mxu0
    %1738 = vmatprep.mubr.bf16.mxu0 0
    %1739 = vmatmul.mubr.bf16.gmra.mrb[0].mxu0 %v1359
    %v1740 = vpop.f32.mrb[0].mxu0
    %v1741 = vadd.f32 %v1532, %v1740
    %v1742 = vpop.f32.mrb[0].mxu0
    %v1743 = vpop.f32.mrb[0].mxu0
    %v1744 = vadd.f32 %v1535, %v1743
    %v1745 = vpop.f32.mrb[0].mxu0
    %1746 = vmatprep.mubr.bf16.mxu0 0
    %1747 = vmatmul.mubr.bf16.gmra.mrb[0].mxu0 %v1360
    %v1748 = vpop.f32.mrb[0].mxu0
    %v1749 = vadd.f32 %v1540, %v1748
    %v1750 = vpop.f32.mrb[0].mxu0
    %v1751 = vpop.f32.mrb[0].mxu0
    %v1752 = vadd.f32 %v1543, %v1751
    %v1753 = vpop.f32.mrb[0].mxu0
    %1754 = vmatprep.mubr.bf16.mxu0 0
    %1755 = vmatmul.mubr.bf16.gmra.mrb[0].mxu0 %v1361
    %v1756 = vpop.f32.mrb[0].mxu0
    %v1757 = vadd.f32 %v1548, %v1756
    %v1758 = vpop.f32.mrb[0].mxu0
    %v1759 = vpop.f32.mrb[0].mxu0
    %v1760 = vadd.f32 %v1551, %v1759
    %v1761 = vpop.f32.mrb[0].mxu0
    %1762 = vmatprep.mubr.bf16.mxu0 0
    %1763 = vmatmul.mubr.bf16.gmra.mrb[0].mxu0 %v1362
    %v1764 = vpop.f32.mrb[0].mxu0
    %v1765 = vadd.f32 %v1556, %v1764
    %v1766 = vpop.f32.mrb[0].mxu0
    %v1767 = vpop.f32.mrb[0].mxu0
    %v1768 = vadd.f32 %v1559, %v1767
    %v1769 = vpop.f32.mrb[0].mxu0
    %1770 = vmatprep.mubr.bf16.mxu0 0
    %1771 = vmatmul.mubr.bf16.gmra.mrb[0].mxu0 %v1363
    %v1772 = vpop.f32.mrb[0].mxu0
    %v1773 = vadd.f32 %v1564, %v1772
    %v1774 = vpop.f32.mrb[0].mxu0
    %v1775 = vpop.f32.mrb[0].mxu0
    %v1776 = vadd.f32 %v1567, %v1775
    %v1777 = vpop.f32.mrb[0].mxu0
    %1778 = vmatprep.mubr.bf16.mxu0 0
    %1779 = vmatmul.mubr.bf16.gmra.mrb[0].mxu0 %v1364
    %v1780 = vpop.f32.mrb[0].mxu0
    %v1781 = vadd.f32 %v1572, %v1780
    %v1782 = vpop.f32.mrb[0].mxu0
    %v1783 = vpop.f32.mrb[0].mxu0
    %v1784 = vadd.f32 %v1575, %v1783
    %v1785 = vpop.f32.mrb[0].mxu0
    %1786 = vmatprep.mubr.bf16.mxu0 0
    %1787 = vmatmul.mubr.bf16.gmra.mrb[0].mxu0 %v1365
    %v1788 = vpop.f32.mrb[0].mxu0
    %v1789 = vadd.f32 %v1580, %v1788
    %v1790 = vpop.f32.mrb[0].mxu0
    %v1791 = vpop.f32.mrb[0].mxu0
    %v1792 = vadd.f32 %v1583, %v1791
    %v1793 = vpop.f32.mrb[0].mxu0
    %1794 = vmatprep.mubr.bf16.mxu0 0
    %1795 = vmatmul.mubr.bf16.gmra.mrb[0].mxu0 %v1366
    %v1796 = vpop.f32.mrb[0].mxu0
    %v1797 = vadd.f32 %v1588, %v1796
    %v1798 = vpop.f32.mrb[0].mxu0
    %v1799 = vpop.f32.mrb[0].mxu0
    %v1800 = vadd.f32 %v1591, %v1799
    %v1801 = vpop.f32.mrb[0].mxu0
    %1802 = vmatprep.mubr.bf16.mxu0 0
    %1803 = vmatmul.mubr.bf16.gmra.mrb[0].mxu0 %v1367
    %v1804 = vpop.f32.mrb[0].mxu0
    %v1805 = vadd.f32 %v1596, %v1804
    %v1806 = vpop.f32.mrb[0].mxu0
    %v1807 = vpop.f32.mrb[0].mxu0
    %v1808 = vadd.f32 %v1599, %v1807
    %v1809 = vpop.f32.mrb[0].mxu0
    %1810 = vmatprep.mubr.bf16.mxu0 0
    %1811 = vmatmul.mubr.bf16.gmra.mrb[0].mxu0 %v1368
    %v1812 = vpop.f32.mrb[0].mxu0
    %v1813 = vadd.f32 %v1604, %v1812
    %v1814 = vpop.f32.mrb[0].mxu0
    %v1815 = vpop.f32.mrb[0].mxu0
    %v1816 = vadd.f32 %v1607, %v1815
    %v1817 = vpop.f32.mrb[0].mxu0
    %1818 = vdwg.mxu0
    %v1819 = vld [vmem:[%s9] sm:$0x1]
    %v1821 = vlaneseq
    %v1822 = vshrl.u32 %v1821, 7
    %v1823 = vsub.s32 0, %v1822
    %v1824 = vrot.slane %v1819, %v1823
    %v1826 = vadd.f32 %v1693, %v1824
    %v1827 = vadd.f32 %v1696, %v1824
    %v1828 = vadd.f32 %v1701, %v1824
    %v1829 = vadd.f32 %v1704, %v1824
    %v1830 = vadd.f32 %v1709, %v1824
    %v1831 = vadd.f32 %v1712, %v1824
    %v1832 = vadd.f32 %v1717, %v1824
    %v1833 = vadd.f32 %v1720, %v1824
    %v1834 = vadd.f32 %v1725, %v1824
    %v1835 = vadd.f32 %v1728, %v1824
    %v1836 = vadd.f32 %v1733, %v1824
    %v1837 = vadd.f32 %v1736, %v1824
    %v1838 = vadd.f32 %v1741, %v1824
    %v1839 = vadd.f32 %v1744, %v1824
    %v1840 = vadd.f32 %v1749, %v1824
    %v1841 = vadd.f32 %v1752, %v1824
    %v1842 = vadd.f32 %v1757, %v1824
    %v1843 = vadd.f32 %v1760, %v1824
    %v1844 = vadd.f32 %v1765, %v1824
    %v1845 = vadd.f32 %v1768, %v1824
    %v1846 = vadd.f32 %v1773, %v1824
    %v1847 = vadd.f32 %v1776, %v1824
    %v1848 = vadd.f32 %v1781, %v1824
    %v1849 = vadd.f32 %v1784, %v1824
    %v1850 = vadd.f32 %v1789, %v1824
    %v1851 = vadd.f32 %v1792, %v1824
    %v1852 = vadd.f32 %v1797, %v1824
    %v1853 = vadd.f32 %v1800, %v1824
    %v1854 = vadd.f32 %v1805, %v1824
    %v1855 = vadd.f32 %v1808, %v1824
    %v1856 = vadd.f32 %v1813, %v1824
    %v1857 = vadd.f32 %v1816, %v1824
    %v1858 = vmax.f32 %v1826, 0.0
    %v1859 = vmax.f32 %v1827, 0.0
    %v1860 = vmax.f32 %v1828, 0.0
    %v1861 = vmax.f32 %v1829, 0.0
    %v1862 = vmax.f32 %v1830, 0.0
    %v1863 = vmax.f32 %v1831, 0.0
    %v1864 = vmax.f32 %v1832, 0.0
    %v1865 = vmax.f32 %v1833, 0.0
    %v1866 = vmax.f32 %v1834, 0.0
    %v1867 = vmax.f32 %v1835, 0.0
    %v1868 = vmax.f32 %v1836, 0.0
    %v1869 = vmax.f32 %v1837, 0.0
    %v1870 = vmax.f32 %v1838, 0.0
    %v1871 = vmax.f32 %v1839, 0.0
    %v1872 = vmax.f32 %v1840, 0.0
    %v1873 = vmax.f32 %v1841, 0.0
    %v1874 = vmax.f32 %v1842, 0.0
    %v1875 = vmax.f32 %v1843, 0.0
    %v1876 = vmax.f32 %v1844, 0.0
    %v1877 = vmax.f32 %v1845, 0.0
    %v1878 = vmax.f32 %v1846, 0.0
    %v1879 = vmax.f32 %v1847, 0.0
    %v1880 = vmax.f32 %v1848, 0.0
    %v1881 = vmax.f32 %v1849, 0.0
    %v1882 = vmax.f32 %v1850, 0.0
    %v1883 = vmax.f32 %v1851, 0.0
    %v1884 = vmax.f32 %v1852, 0.0
    %v1885 = vmax.f32 %v1853, 0.0
    %v1886 = vmax.f32 %v1854, 0.0
    %v1887 = vmax.f32 %v1855, 0.0
    %v1888 = vmax.f32 %v1856, 0.0
    %v1889 = vmax.f32 %v1857, 0.0
    %v1890 = vld [vmem:[%s2] sm:$0xff]
    %v1891 = vpack.c.bf16 %v1859, %v1858
    %v1892 = vpack.c.bf16 %v1861, %v1860
    %v1893 = vpack.c.bf16 %v1863, %v1862
    %v1894 = vpack.c.bf16 %v1865, %v1864
    %v1895 = vpack.c.bf16 %v1867, %v1866
    %v1896 = vpack.c.bf16 %v1869, %v1868
    %v1897 = vpack.c.bf16 %v1871, %v1870
    %v1898 = vpack.c.bf16 %v1873, %v1872
    %v1899 = vpack.c.bf16 %v1875, %v1874
    %v1900 = vpack.c.bf16 %v1877, %v1876
    %v1901 = vpack.c.bf16 %v1879, %v1878
    %v1902 = vpack.c.bf16 %v1881, %v1880
    %v1903 = vpack.c.bf16 %v1883, %v1882
    %v1904 = vpack.c.bf16 %v1885, %v1884
    %v1905 = vpack.c.bf16 %v1887, %v1886
    %v1906 = vpack.c.bf16 %v1889, %v1888
    %v1908 = vunpack.c.l.b16 %v1890
    %v1909 = vunpack.c.h.b16 %v1890
    %v1910 = vpack.c.b16 %v1908, %v1908
    %v1911 = vpack.c.b16 %v1909, %v1909
    %1914 = vmatprep.subr.bf16.mxu0 0
    %1915 = vmatpush1.bf16.msra.mxu0 %v1891
    %1916 = vmatprep.subr.bf16.mxu0 0
    %1917 = vmatpush1.bf16.msra.mxu0 %v1892
    %1918 = vmatprep.subr.bf16.mxu0 0
    %1919 = vmatpush1.bf16.msra.mxu0 %v1893
    %1920 = vmatprep.subr.bf16.mxu0 0
    %1921 = vmatpush1.bf16.msra.mxu0 %v1894
    %1922 = vmatprep.subr.bf16.mxu0 0
    %1923 = vmatpush1.bf16.msra.mxu0 %v1895
    %1924 = vmatprep.subr.bf16.mxu0 0
    %1925 = vmatpush1.bf16.msra.mxu0 %v1896
    %1926 = vmatprep.subr.bf16.mxu0 0
    %1927 = vmatpush1.bf16.msra.mxu0 %v1897
    %1928 = vmatprep.subr.bf16.mxu0 0
    %1929 = vmatpush1.bf16.msra.mxu0 %v1898
    %1930 = vmatprep.subr.bf16.mxu0 0
    %1931 = vmatpush1.bf16.msra.mxu0 %v1899
    %1932 = vmatprep.subr.bf16.mxu0 0
    %1933 = vmatpush1.bf16.msra.mxu0 %v1900
    %1934 = vmatprep.subr.bf16.mxu0 0
    %1935 = vmatpush1.bf16.msra.mxu0 %v1901
    %1936 = vmatprep.subr.bf16.mxu0 0
    %1937 = vmatpush1.bf16.msra.mxu0 %v1902
    %1938 = vmatprep.subr.bf16.mxu0 0
    %1939 = vmatpush1.bf16.msra.mxu0 %v1903
    %1940 = vmatprep.subr.bf16.mxu0 0
    %1941 = vmatpush1.bf16.msra.mxu0 %v1904
    %1942 = vmatprep.subr.bf16.mxu0 0
    %1943 = vmatpush1.bf16.msra.mxu0 %v1905
    %1944 = vmatprep.subr.bf16.mxu0 0
    %1945 = vmatpush1.bf16.msra.mxu0 %v1906
    %1946 = vmatprep.mubr.bf16.mxu0 %v1911
    %1947 = vmatmul.mubr.bf16.gmra.mrb[0].mxu0 %v1910
    %v1948 = vpop.f32.mrb[0].mxu0
    %v1949 = vadd.f32 0.0, %v1948
    %v1950 = vpop.f32.mrb[0].mxu0
    %v1951 = vpop.f32.mrb[0].mxu0
    %v1952 = vpop.f32.mrb[0].mxu0
    %1953 = vdwg.mxu0
    %v1954 = vld [vmem:[%s3] sm:$0xff]
    %1956 = vset.pattern.permute.xlu0 0
    %1957 = vperm.xlu0 %1956, %v1954
    %v1958 = vpop.permute.xlu0 %1957
    %v1960 = vrcp.pop %v1958
    %v1961 = vmul.f32 %v1949, %v1960
    %v1962 = vld [vmem:[#allocation13] sm:$0xff]
    %v1963 = vld [vmem:[#allocation13 + $0x8] sm:$0xff]
    %v1964 = vld [vmem:[#allocation13 + $0x10] sm:$0xff]
    %v1965 = vld [vmem:[#allocation13 + $0x18] sm:$0xff]
    %v1966 = vld [vmem:[#allocation13 + $0x20] sm:$0xff]
    %v1967 = vld [vmem:[#allocation13 + $0x28] sm:$0xff]
    %v1968 = vld [vmem:[#allocation13 + $0x30] sm:$0xff]
    %v1969 = vld [vmem:[#allocation13 + $0x38] sm:$0xff]
    %v1970 = vld [vmem:[#allocation13 + $0x40] sm:$0xff]
    %v1971 = vld [vmem:[#allocation13 + $0x48] sm:$0xff]
    %v1972 = vld [vmem:[#allocation13 + $0x50] sm:$0xff]
    %v1973 = vld [vmem:[#allocation13 + $0x58] sm:$0xff]
    %v1974 = vld [vmem:[#allocation13 + $0x60] sm:$0xff]
    %v1975 = vld [vmem:[#allocation13 + $0x68] sm:$0xff]
    %v1976 = vld [vmem:[#allocation13 + $0x70] sm:$0xff]
    %v1977 = vld [vmem:[#allocation13 + $0x78] sm:$0xff]
    %v1978 = vld [vmem:[%s11] sm:$0x1]
    %v1980 = vlaneseq
    %v1981 = vshrl.u32 %v1980, 7
    %v1982 = vsub.s32 0, %v1981
    %v1983 = vrot.slane %v1978, %v1982
    %1985 = vmatprep.subr.mxu0 0.0
    %1986 = vmatpush1.msra.mxu0 %v1962
    %1987 = vmatprep.subr.mxu0 0.0
    %1988 = vmatpush1.msra.mxu0 %v1963
    %1989 = vmatprep.subr.mxu0 0.0
    %1990 = vmatpush1.msra.mxu0 %v1964
    %1991 = vmatprep.subr.mxu0 0.0
    %1992 = vmatpush1.msra.mxu0 %v1965
    %1993 = vmatprep.subr.mxu0 0.0
    %1994 = vmatpush1.msra.mxu0 %v1966
    %1995 = vmatprep.subr.mxu0 0.0
    %1996 = vmatpush1.msra.mxu0 %v1967
    %1997 = vmatprep.subr.mxu0 0.0
    %1998 = vmatpush1.msra.mxu0 %v1968
    %1999 = vmatprep.subr.mxu0 0.0
    %2000 = vmatpush1.msra.mxu0 %v1969
    %2001 = vmatprep.subr.mxu0 0.0
    %2002 = vmatpush1.msra.mxu0 %v1970
    %2003 = vmatprep.subr.mxu0 0.0
    %2004 = vmatpush1.msra.mxu0 %v1971
    %2005 = vmatprep.subr.mxu0 0.0
    %2006 = vmatpush1.msra.mxu0 %v1972
    %2007 = vmatprep.subr.mxu0 0.0
    %2008 = vmatpush1.msra.mxu0 %v1973
    %2009 = vmatprep.subr.mxu0 0.0
    %2010 = vmatpush1.msra.mxu0 %v1974
    %2011 = vmatprep.subr.mxu0 0.0
    %2012 = vmatpush1.msra.mxu0 %v1975
    %2013 = vmatprep.subr.mxu0 0.0
    %2014 = vmatpush1.msra.mxu0 %v1976
    %2015 = vmatprep.subr.mxu0 0.0
    %2016 = vmatpush1.msra.mxu0 %v1977
    %2017 = vmatprep.subr.mxu0 0.0
    %2018 = vmatpush1.msra.mxu0 0.0
    %2019 = vmatprep.subr.mxu0 0.0
    %2020 = vmatpush1.msra.mxu0 0.0
    %2021 = vmatprep.subr.mxu0 0.0
    %2022 = vmatpush1.msra.mxu0 0.0
    %2023 = vmatprep.subr.mxu0 0.0
    %2024 = vmatpush1.msra.mxu0 0.0
    %2025 = vmatprep.subr.mxu0 0.0
    %2026 = vmatpush1.msra.mxu0 0.0
    %2027 = vmatprep.subr.mxu0 0.0
    %2028 = vmatpush1.msra.mxu0 0.0
    %2029 = vmatprep.subr.mxu0 0.0
    %2030 = vmatpush1.msra.mxu0 0.0
    %2031 = vmatprep.subr.mxu0 0.0
    %2032 = vmatpush1.msra.mxu0 0.0
    %2033 = vmatprep.subr.mxu0 0.0
    %2034 = vmatpush1.msra.mxu0 0.0
    %2035 = vmatprep.subr.mxu0 0.0
    %2036 = vmatpush1.msra.mxu0 0.0
    %2037 = vmatprep.subr.mxu0 0.0
    %2038 = vmatpush1.msra.mxu0 0.0
    %2039 = vmatprep.subr.mxu0 0.0
    %2040 = vmatpush1.msra.mxu0 0.0
    %2041 = vmatprep.subr.mxu0 0.0
    %2042 = vmatpush1.msra.mxu0 0.0
    %2043 = vmatprep.subr.mxu0 0.0
    %2044 = vmatpush1.msra.mxu0 0.0
    %2045 = vmatprep.subr.mxu0 0.0
    %2046 = vmatpush1.msra.mxu0 0.0
    %2047 = vmatprep.subr.mxu0 0.0
    %2048 = vmatpush1.msra.mxu0 0.0
    %2049 = vmatprep.mubr.f32.mxu0 0.0
    %2050 = vmatmul.mubr.f32.gmra.mrb[0].mxu0 %v1961
    %v2051 = vpop.f32.mrb[0].mxu0
    %v2052 = vadd.f32 %v1983, %v2051
    %v2053 = vpop.f32.mrb[0].mxu0
    %2054 = vdwg.mxu0
    %v2055 = vmax.f32 %v2052, 0.0
    %v2056 = vld [vmem:[#allocation14] sm:$0xff]
    %v2057 = vld [vmem:[#allocation14 + $0x8] sm:$0xff]
    %v2058 = vld [vmem:[#allocation14 + $0x10] sm:$0xff]
    %v2059 = vld [vmem:[#allocation14 + $0x18] sm:$0xff]
    %v2060 = vld [vmem:[#allocation14 + $0x20] sm:$0xff]
    %v2061 = vld [vmem:[#allocation14 + $0x28] sm:$0xff]
    %v2062 = vld [vmem:[#allocation14 + $0x30] sm:$0xff]
    %v2063 = vld [vmem:[#allocation14 + $0x38] sm:$0xff]
    %v2064 = vld [vmem:[#allocation14 + $0x40] sm:$0xff]
    %v2065 = vld [vmem:[#allocation14 + $0x48] sm:$0xff]
    %v2066 = vld [vmem:[#allocation14 + $0x50] sm:$0xff]
    %v2067 = vld [vmem:[#allocation14 + $0x58] sm:$0xff]
    %v2068 = vld [vmem:[#allocation14 + $0x60] sm:$0xff]
    %v2069 = vld [vmem:[#allocation14 + $0x68] sm:$0xff]
    %v2070 = vld [vmem:[#allocation14 + $0x70] sm:$0xff]
    %v2071 = vld [vmem:[#allocation14 + $0x78] sm:$0xff]
    %v2072 = vld [vmem:[%s13] sm:$0x1]
    %v2074 = vlaneseq
    %v2075 = vshrl.u32 %v2074, 7
    %v2076 = vsub.s32 0, %v2075
    %v2077 = vrot.slane %v2072, %v2076
    %2079 = vmatprep.subr.mxu0 0.0
    %2080 = vmatpush1.msra.mxu0 %v2056
    %2081 = vmatprep.subr.mxu0 0.0
    %2082 = vmatpush1.msra.mxu0 %v2057
    %2083 = vmatprep.subr.mxu0 0.0
    %2084 = vmatpush1.msra.mxu0 %v2058
    %2085 = vmatprep.subr.mxu0 0.0
    %2086 = vmatpush1.msra.mxu0 %v2059
    %2087 = vmatprep.subr.mxu0 0.0
    %2088 = vmatpush1.msra.mxu0 %v2060
    %2089 = vmatprep.subr.mxu0 0.0
    %2090 = vmatpush1.msra.mxu0 %v2061
    %2091 = vmatprep.subr.mxu0 0.0
    %2092 = vmatpush1.msra.mxu0 %v2062
    %2093 = vmatprep.subr.mxu0 0.0
    %2094 = vmatpush1.msra.mxu0 %v2063
    %2095 = vmatprep.subr.mxu0 0.0
    %2096 = vmatpush1.msra.mxu0 %v2064
    %2097 = vmatprep.subr.mxu0 0.0
    %2098 = vmatpush1.msra.mxu0 %v2065
    %2099 = vmatprep.subr.mxu0 0.0
    %2100 = vmatpush1.msra.mxu0 %v2066
    %2101 = vmatprep.subr.mxu0 0.0
    %2102 = vmatpush1.msra.mxu0 %v2067
    %2103 = vmatprep.subr.mxu0 0.0
    %2104 = vmatpush1.msra.mxu0 %v2068
    %2105 = vmatprep.subr.mxu0 0.0
    %2106 = vmatpush1.msra.mxu0 %v2069
    %2107 = vmatprep.subr.mxu0 0.0
    %2108 = vmatpush1.msra.mxu0 %v2070
    %2109 = vmatprep.subr.mxu0 0.0
    %2110 = vmatpush1.msra.mxu0 %v2071
    %2111 = vmatprep.subr.mxu0 0.0
    %2112 = vmatpush1.msra.mxu0 0.0
    %2113 = vmatprep.subr.mxu0 0.0
    %2114 = vmatpush1.msra.mxu0 0.0
    %2115 = vmatprep.subr.mxu0 0.0
    %2116 = vmatpush1.msra.mxu0 0.0
    %2117 = vmatprep.subr.mxu0 0.0
    %2118 = vmatpush1.msra.mxu0 0.0
    %2119 = vmatprep.subr.mxu0 0.0
    %2120 = vmatpush1.msra.mxu0 0.0
    %2121 = vmatprep.subr.mxu0 0.0
    %2122 = vmatpush1.msra.mxu0 0.0
    %2123 = vmatprep.subr.mxu0 0.0
    %2124 = vmatpush1.msra.mxu0 0.0
    %2125 = vmatprep.subr.mxu0 0.0
    %2126 = vmatpush1.msra.mxu0 0.0
    %2127 = vmatprep.subr.mxu0 0.0
    %2128 = vmatpush1.msra.mxu0 0.0
    %2129 = vmatprep.subr.mxu0 0.0
    %2130 = vmatpush1.msra.mxu0 0.0
    %2131 = vmatprep.subr.mxu0 0.0
    %2132 = vmatpush1.msra.mxu0 0.0
    %2133 = vmatprep.subr.mxu0 0.0
    %2134 = vmatpush1.msra.mxu0 0.0
    %2135 = vmatprep.subr.mxu0 0.0
    %2136 = vmatpush1.msra.mxu0 0.0
    %2137 = vmatprep.subr.mxu0 0.0
    %2138 = vmatpush1.msra.mxu0 0.0
    %2139 = vmatprep.subr.mxu0 0.0
    %2140 = vmatpush1.msra.mxu0 0.0
    %2141 = vmatprep.subr.mxu0 0.0
    %2142 = vmatpush1.msra.mxu0 0.0
    %2143 = vmatprep.mubr.f32.mxu0 0.0
    %2144 = vmatmul.mubr.f32.gmra.mrb[0].mxu0 %v2055
    %v2145 = vpop.f32.mrb[0].mxu0
    %v2146 = vadd.f32 %v2077, %v2145
    %v2147 = vpop.f32.mrb[0].mxu0
    %2148 = vdwg.mxu0
    %2149 = vst [vmem:[#allocation16] sm:$0xff] %v2146
    // Predicated region
    $region90: #{tpu_custom_call.1} parent=1 // pred_check
      _
    $region91: #{tpu_custom_call.1} parent=1 // pred_check_branch
      %2151 = sbr.rel (0) target = $region93
    $region92: #{tpu_custom_call.1} parent=1 // pred_region
      %s2153 = ssub.s32 128, 128
      %2154 = vsyncadd [#allocation4], %s2153
      %s2156 = sshll.u32 [#allocation16], 4
      %s2157 = int_to_ptr.vmem [resolvable:$true] %s2156
      %2159 = dma.vmem_to_hbm [thread:$0]  %s2157, 128, %s14, [#allocation4]
    $region93: #{tpu_custom_call.1} parent=1 // pred_fallthru
      _
    // Predicated region
    $region94: #{tpu_custom_call.1} parent=1 // pred_check
      _
    $region95: #{tpu_custom_call.1} parent=1 // pred_check_branch
      %2161 = sbr.rel (0) target = $region97
    $region96: #{tpu_custom_call.1} parent=1 // pred_region
      %2162 = dma.done [#allocation4], 128
    $region97: #{tpu_custom_call.1} parent=1 // pred_fallthru
      _
    %2163 = vsyncpa [#allocation3], 1
    %2164 = vsyncpa [#allocation6], 1
    %2165 = vsyncpa [#allocation9], 1
    %2166 = vsyncpa [#allocation12], 1
    %2167 = vsyncpa [#allocation15], 1
    %2168 = vsyncpa [#allocation4], 1

</llo_original>
